<compile_context>
chip_gen: v7x
topology: tpu7x:2x2x1
jax: 0.10.0
libtpu: 0.0.40
codegen_flags: <defaults>
</compile_context>

<pallas_src>
import functools

import jax
import jax.numpy as jnp
from jax.experimental import pallas as pl
from jax.experimental.pallas import tpu as pltpu

# Exact-f32 matmuls for both the kernel and the pure-JAX reference so the
# packed formulation matches the reference to 1e-5.  (Per review: cast the
# feature stream + W1 to bf16 instead if ~1e-3 parity is acceptable — it
# halves HBM bytes for the dominant input.)
jax.config.update("jax_default_matmul_precision", "highest")


def _cdiv(a, b):
    return (a + b - 1) // b


def _round_up(a, b):
    return _cdiv(a, b) * b


def _combiner_kernel(f1p_ref, gate_ref, w1bd_ref, b1t_ref, expand_ref,
                     segsum_ref, rowsel_ref, combine_ref, out_ref, *,
                     n_valid, n_pad):
    """One node-block step.

    f1p_ref    : (nb*Q, ROW)   lane-packed neighbor features (P neighbors/row)
    gate_ref   : (nb, ROW)     per-node tanh(att2(f2))*w3, lane-tiled P times
    w1bd_ref   : (ROW, ROW)    block-diagonal att1 weight^T   (resident)
    b1t_ref    : (1, ROW)      att1 bias, lane-tiled P times  (resident)
    expand_ref : (nb*Q, nb)    0/1 node -> packed-row expansion (resident)
    segsum_ref : (ROW, n_pad)  0/1 lane-segment summer          (resident)
    rowsel_ref : (nb*Q, n_pad) 0/1 packed-row selector          (resident)
    combine_ref: (nb, nb*Q)    0/1 packed-row -> node combiner  (resident)
    out_ref    : (nb, n_pad)   per-node softmax over the neighbor (lane) axis
    """
    # att1 branch: one dense MXU matmul + EUP tanh on fully packed vregs.
    h1 = jnp.tanh(
        jnp.dot(f1p_ref[...], w1bd_ref[...], preferred_element_type=jnp.float32)
        + b1t_ref[...])                                        # (nb*Q, ROW)

    # Broadcast each node's gate row to its Q packed rows via a 0/1 matmul on
    # the (idle) MXU — avoids a sublane-relayout repeat.
    gate_rows = jnp.dot(expand_ref[...], gate_ref[...],
                        preferred_element_type=jnp.float32)    # (nb*Q, ROW)
    prod = h1 * gate_rows

    # att3 logits: lane-segment sums, then row-select + regroup to a
    # (nodes, neighbors) tile — both as constant 0/1 matmuls.  b3 is dropped:
    # the softmax over the neighbor axis is shift-invariant (exact).
    seg = jnp.dot(prod, segsum_ref[...],
                  preferred_element_type=jnp.float32)          # (nb*Q, n_pad)
    z = jnp.dot(combine_ref[...], seg * rowsel_ref[...],
                preferred_element_type=jnp.float32)            # (nb, n_pad)

    if n_valid < n_pad:                                        # mask padded neighbors
        lane = jax.lax.broadcasted_iota(jnp.int32, z.shape, 1)
        z = jnp.where(lane < n_valid, z, -jnp.inf)

    # TODO(synk): training-mode dropout (stateful per-element PRNG mask) is not
    # emitted; this kernel implements the eval-mode forward only.

    # Numerically-stable softmax over the neighbor (lane) axis.
    m = jnp.max(z, axis=-1, keepdims=True)
    e = jnp.exp(z - m)
    s = jnp.sum(e, axis=-1, keepdims=True)
    out_ref[...] = e * pl.reciprocal(s, approx=False)


def node_cross_combiner_batched(feature1, feature2, params):
    """feature1: (B, N, D) neighbor features, feature2: (B, D) node features.
    Returns attention weights (B, N, 1): per-node softmax over the N neighbors."""
    b, n, d = feature1.shape
    f32 = jnp.float32
    w1, b1, w2, b2, w3, b3 = (jnp.asarray(p, f32) for p in params)
    del b3  # softmax over the neighbor axis is shift-invariant

    feature1 = feature1.astype(f32)
    feature2 = feature2.astype(f32)

    # Hoisted feature2 branch folded with the att3 row: one tiny XLA op.
    gate = jnp.tanh(feature2 @ w2.T + b2) * w3.reshape(1, d)          # (B, D)

    # ---- lane-packing geometry (P neighbor rows per 128-lane vreg) ---------
    if d <= 128:
        d_pad = 1 << max(0, (d - 1).bit_length())     # next pow2 -> divides 128
        row = 128
    else:
        d_pad = _round_up(d, 128)
        row = d_pad
    p_pack = row // d_pad                             # neighbors packed per row
    n_pad = _round_up(n, p_pack)
    q_rows = n_pad // p_pack                          # packed rows per node
    # NOTE: the 0/1 selector matrices scale ~ O(nb*n_pad^2/P); this packed path
    # targets modest graph fan-ins (n_neighs up to a few hundred).

    # ---- node-block size: big blocks, but keep the grid >= 2 steps ---------
    target_rows = 1024                                # unpacked feature rows/step
    nb = max(8, (target_rows // n_pad) // 8 * 8)
    nb = min(nb, 256, _round_up(b, 8))
    if b > 8 and _cdiv(b, nb) < 2:                    # let both v7x TCs run
        nb = max(8, _round_up(_cdiv(b, 2), 8))
    b_pad = _round_up(b, nb)

    # ---- pad only when shapes require it (common case: pure reshape) -------
    w1t = w1.T
    b1v = b1.reshape(1, d)
    f1 = feature1
    if d_pad != d:
        f1 = jnp.pad(f1, ((0, 0), (0, 0), (0, d_pad - d)))
        w1t = jnp.pad(w1t, ((0, d_pad - d), (0, d_pad - d)))
        b1v = jnp.pad(b1v, ((0, 0), (0, d_pad - d)))
        gate = jnp.pad(gate, ((0, 0), (0, d_pad - d)))
    if n_pad != n:
        f1 = jnp.pad(f1, ((0, 0), (0, n_pad - n), (0, 0)))
    if b_pad != b:
        f1 = jnp.pad(f1, ((0, b_pad - b), (0, 0), (0, 0)))
        gate = jnp.pad(gate, ((0, b_pad - b), (0, 0)))

    f1p = f1.reshape(b_pad * q_rows, row)             # contiguous -> no HBM copy
    gate_t = jnp.tile(gate, (1, p_pack))              # (b_pad, ROW), tiny

    # ---- resident constants (constant index_map -> DMA'd once) -------------
    w1bd = jnp.kron(jnp.eye(p_pack, dtype=f32), w1t)              # (ROW, ROW)
    b1t = jnp.tile(b1v, (1, p_pack))                              # (1, ROW)
    rb = nb * q_rows
    r_idx = jnp.arange(rb)
    j_idx = jnp.arange(n_pad)
    expand = (r_idx[:, None] // q_rows
              == jnp.arange(nb)[None, :]).astype(f32)             # (rb, nb)
    combine = expand.T                                            # (nb, rb)
    segsum = (jnp.arange(row)[:, None] // d_pad
              == (j_idx[None, :] % p_pack)).astype(f32)           # (ROW, n_pad)
    rowsel = ((j_idx[None, :] // p_pack)
              == (r_idx[:, None] % q_rows)).astype(f32)           # (rb, n_pad)

    kernel = functools.partial(_combiner_kernel, n_valid=n, n_pad=n_pad)

    att = pl.pallas_call(
        kernel,
        out_shape=jax.ShapeDtypeStruct((b_pad, n_pad), f32),
        grid=(b_pad // nb,),
        in_specs=[
            pl.BlockSpec((rb, row), lambda i: (i, 0)),        # packed feature1
            pl.BlockSpec((nb, row), lambda i: (i, 0)),        # per-node gate
            pl.BlockSpec((row, row), lambda i: (0, 0)),       # W1 block-diag^T
            pl.BlockSpec((1, row), lambda i: (0, 0)),         # b1 (lane-tiled)
            pl.BlockSpec((rb, nb), lambda i: (0, 0)),         # expand
            pl.BlockSpec((row, n_pad), lambda i: (0, 0)),     # segsum
            pl.BlockSpec((rb, n_pad), lambda i: (0, 0)),      # rowsel
            pl.BlockSpec((nb, rb), lambda i: (0, 0)),         # combine
        ],
        # Output is only ~1/D of total bytes; lane-dense repack is a follow-up.
        out_specs=pl.BlockSpec((nb, n_pad), lambda i: (i, 0)),
        compiler_params=pltpu.CompilerParams(
            # Independent node blocks: shards across both v7x TCs; neutral on
            # single-TC v5e/v6e.  For D >= 512 also re-derive the VMEM budget
            # (vmem_limit_bytes, Buffered(1) on resident weights).
            dimension_semantics=("parallel",)),
    )(f1p, gate_t, w1bd, b1t, expand, segsum, rowsel, combine)

    return att[:b, :n, None]                          # (B, N, 1)


def node_cross_combiner_forward(feature1, feature2, params):
    """Single-node forward matching the torch module:
    feature1 (n_neighs, D), feature2 (1, D) -> att (n_neighs, 1)."""
    return node_cross_combiner_batched(feature1[None], feature2, params)[0]


def init_params(key, embed_dim):
    """Deterministic PyTorch-Linear-style init: U(-1/sqrt(fan_in), 1/sqrt(fan_in))."""
    ks = jax.random.split(key, 6)
    bound = 1.0 / jnp.sqrt(embed_dim)
    w1 = jax.random.uniform(ks[0], (embed_dim, embed_dim), jnp.float32, -bound, bound)
    b1 = jax.random.uniform(ks[1], (embed_dim,), jnp.float32, -bound, bound)
    w2 = jax.random.uniform(ks[2], (embed_dim, embed_dim), jnp.float32, -bound, bound)
    b2 = jax.random.uniform(ks[3], (embed_dim,), jnp.float32, -bound, bound)
    w3 = jax.random.uniform(ks[4], (1, embed_dim), jnp.float32, -bound, bound)
    b3 = jax.random.uniform(ks[5], (1,), jnp.float32, -bound, bound)
    return (w1, b1, w2, b2, w3, b3)


def reference_forward(feature1, feature2, params):
    w1, b1, w2, b2, w3, b3 = params
    n = feature1.shape[0]
    f2_rep = jnp.tile(feature2, (n, 1))
    x = jnp.tanh(feature1 @ w1.T + b1) * jnp.tanh(f2_rep @ w2.T + b2)
    z = x @ w3.T + b3
    return jax.nn.softmax(z, axis=0)


if __name__ == "__main__":
    embed_dim = 32
    n_neighs = 8

    key = jax.random.PRNGKey(0)
    k_f1, k_f2, k_p, k_b1, k_b2, k_r1, k_r2 = jax.random.split(key, 7)
    params = init_params(k_p, embed_dim)

    # --- single-node forward: the torch module's contract -------------------
    feature1 = jax.random.normal(k_f1, (n_neighs, embed_dim), jnp.float32)
    feature2 = jax.random.normal(k_f2, (1, embed_dim), jnp.float32)

    att = node_cross_combiner_forward(feature1, feature2, params)
    jax.block_until_ready(att)
    ref = reference_forward(feature1, feature2, params)
    assert att.shape == (n_neighs, 1)
    assert jnp.allclose(att, ref, atol=1e-5, rtol=1e-5)
    assert jnp.allclose(jnp.sum(att), 1.0, atol=1e-5)

    # --- batched path: many nodes, two grid steps (both v7x TCs) ------------
    n_nodes = 32
    f1b = jax.random.normal(k_b1, (n_nodes, n_neighs, embed_dim), jnp.float32)
    f2b = jax.random.normal(k_b2, (n_nodes, embed_dim), jnp.float32)
    attb = node_cross_combiner_batched(f1b, f2b, params)
    jax.block_until_ready(attb)
    refb = jax.vmap(lambda a, c: reference_forward(a, c[None], params))(f1b, f2b)
    assert attb.shape == (n_nodes, n_neighs, 1)
    assert jnp.allclose(attb, refb, atol=1e-5, rtol=1e-5)
    assert jnp.allclose(jnp.sum(attb, axis=(1, 2)), jnp.ones((n_nodes,)), atol=1e-5)

    # --- ragged neighbor count: exercises the padded-lane -inf mask ---------
    n_rag = 6
    f1r = jax.random.normal(k_r1, (16, n_rag, embed_dim), jnp.float32)
    f2r = jax.random.normal(k_r2, (16, embed_dim), jnp.float32)
    att_r = node_cross_combiner_batched(f1r, f2r, params)
    jax.block_until_ready(att_r)
    refr = jax.vmap(lambda a, c: reference_forward(a, c[None], params))(f1r, f2r)
    assert att_r.shape == (16, n_rag, 1)
    assert jnp.allclose(att_r, refr, atol=1e-5, rtol=1e-5)

    print("KERNEL_OK")
</pallas_src>

<mosaic_0001>
module attributes {stable_mosaic.version = 11 : i64} {
  func.func @_combiner_kernel(%arg0: i32, %arg1: memref<16x128xf32, #tpu.memory_space<vmem>>, %arg2: memref<8x128xf32, #tpu.memory_space<vmem>>, %arg3: memref<128x128xf32, #tpu.memory_space<vmem>>, %arg4: memref<1x128xf32, #tpu.memory_space<vmem>>, %arg5: memref<16x8xf32, #tpu.memory_space<vmem>>, %arg6: memref<128x8xf32, #tpu.memory_space<vmem>>, %arg7: memref<16x8xf32, #tpu.memory_space<vmem>>, %arg8: memref<8x16xf32, #tpu.memory_space<vmem>>, %arg9: memref<8x8xf32, #tpu.memory_space<vmem>>) attributes {dimension_semantics = [#tpu.dimension_semantics<parallel>], iteration_bounds = array<i64: 1>, scalar_prefetch = 0 : i64, scratch_operands = 0 : i64, tpu.core_type = #tpu.core_type<tc>, window_params = [{transform_indices = @transform_0, window_bounds = array<i64: 16, 128>}, {transform_indices = @transform_1, window_bounds = array<i64: 8, 128>}, {pipeline_mode = #tpu.pipeline_mode<synchronous>, transform_indices = @transform_2, window_bounds = array<i64: 128, 128>}, {pipeline_mode = #tpu.pipeline_mode<synchronous>, transform_indices = @transform_3, window_bounds = array<i64: 1, 128>}, {pipeline_mode = #tpu.pipeline_mode<synchronous>, transform_indices = @transform_4, window_bounds = array<i64: 16, 8>}, {pipeline_mode = #tpu.pipeline_mode<synchronous>, transform_indices = @transform_5, window_bounds = array<i64: 128, 8>}, {pipeline_mode = #tpu.pipeline_mode<synchronous>, transform_indices = @transform_6, window_bounds = array<i64: 16, 8>}, {pipeline_mode = #tpu.pipeline_mode<synchronous>, transform_indices = @transform_7, window_bounds = array<i64: 8, 16>}, {transform_indices = @transform_8, window_bounds = array<i64: 8, 8>}]} {
    %c0 = arith.constant 0 : index
    %c0_0 = arith.constant 0 : index
    %0 = vector.load %arg1[%c0, %c0_0] : memref<16x128xf32, #tpu.memory_space<vmem>>, vector<16x128xf32>
    %c0_1 = arith.constant 0 : index
    %c0_2 = arith.constant 0 : index
    %1 = vector.load %arg3[%c0_1, %c0_2] : memref<128x128xf32, #tpu.memory_space<vmem>>, vector<128x128xf32>
    %cst = arith.constant dense<0.000000e+00> : vector<16x128xf32>
    %2 = tpu.matmul %0, %1, %cst {dimension_numbers = #tpu.dot_dimension_numbers<[1], [0], [0], [1], [0, 0, 1, 1], [], []>, precision = #tpu.contract_precision<fp32>} : vector<16x128xf32>, vector<128x128xf32>, vector<16x128xf32> -> vector<16x128xf32>
    %c0_3 = arith.constant 0 : index
    %c0_4 = arith.constant 0 : index
    %3 = vector.load %arg4[%c0_3, %c0_4] : memref<1x128xf32, #tpu.memory_space<vmem>>, vector<1x128xf32>
    %4 = vector.broadcast %3 : vector<1x128xf32> to vector<16x128xf32>
    %5 = arith.addf %2, %4 : vector<16x128xf32>
    %6 = math.tanh %5 : vector<16x128xf32>
    %c0_5 = arith.constant 0 : index
    %c0_6 = arith.constant 0 : index
    %7 = vector.load %arg5[%c0_5, %c0_6] : memref<16x8xf32, #tpu.memory_space<vmem>>, vector<16x8xf32>
    %c0_7 = arith.constant 0 : index
    %c0_8 = arith.constant 0 : index
    %8 = vector.load %arg2[%c0_7, %c0_8] : memref<8x128xf32, #tpu.memory_space<vmem>>, vector<8x128xf32>
    %cst_9 = arith.constant dense<0.000000e+00> : vector<16x128xf32>
    %9 = tpu.matmul %7, %8, %cst_9 {dimension_numbers = #tpu.dot_dimension_numbers<[1], [0], [0], [1], [0, 0, 1, 1], [], []>, precision = #tpu.contract_precision<fp32>} : vector<16x8xf32>, vector<8x128xf32>, vector<16x128xf32> -> vector<16x128xf32>
    %10 = arith.mulf %6, %9 : vector<16x128xf32>
    %c0_10 = arith.constant 0 : index
    %c0_11 = arith.constant 0 : index
    %11 = vector.load %arg6[%c0_10, %c0_11] : memref<128x8xf32, #tpu.memory_space<vmem>>, vector<128x8xf32>
    %cst_12 = arith.constant dense<0.000000e+00> : vector<16x8xf32>
    %12 = tpu.matmul %10, %11, %cst_12 {dimension_numbers = #tpu.dot_dimension_numbers<[1], [0], [0], [1], [0, 0, 1, 1], [], []>, precision = #tpu.contract_precision<fp32>} : vector<16x128xf32>, vector<128x8xf32>, vector<16x8xf32> -> vector<16x8xf32>
    %c0_13 = arith.constant 0 : index
    %c0_14 = arith.constant 0 : index
    %13 = vector.load %arg8[%c0_13, %c0_14] : memref<8x16xf32, #tpu.memory_space<vmem>>, vector<8x16xf32>
    %c0_15 = arith.constant 0 : index
    %c0_16 = arith.constant 0 : index
    %14 = vector.load %arg7[%c0_15, %c0_16] : memref<16x8xf32, #tpu.memory_space<vmem>>, vector<16x8xf32>
    %15 = arith.mulf %12, %14 : vector<16x8xf32>
    %cst_17 = arith.constant dense<0.000000e+00> : vector<8x8xf32>
    %16 = tpu.matmul %13, %15, %cst_17 {dimension_numbers = #tpu.dot_dimension_numbers<[1], [0], [0], [1], [0, 0, 1, 1], [], []>, precision = #tpu.contract_precision<fp32>} : vector<8x16xf32>, vector<16x8xf32>, vector<8x8xf32> -> vector<8x8xf32>
    %cst_18 = arith.constant dense<0xFF800000> : vector<8xf32>
    %17 = vector.multi_reduction <maximumf>, %16, %cst_18 [1] : vector<8x8xf32> to vector<8xf32>
    %18 = vector.shape_cast %17 : vector<8xf32> to vector<8x1xf32>
    %19 = vector.broadcast %18 : vector<8x1xf32> to vector<8x8xf32>
    %20 = arith.subf %16, %19 : vector<8x8xf32>
    %21 = math.exp %20 : vector<8x8xf32>
    %cst_19 = arith.constant dense<0.000000e+00> : vector<8xf32>
    %22 = vector.multi_reduction <add>, %21, %cst_19 [1] : vector<8x8xf32> to vector<8xf32>
    %23 = vector.shape_cast %22 : vector<8xf32> to vector<8x1xf32>
    %24 = tpu.reciprocal %23 : vector<8x1xf32> -> vector<8x1xf32>
    %25 = vector.broadcast %24 : vector<8x1xf32> to vector<8x8xf32>
    %26 = arith.mulf %21, %25 : vector<8x8xf32>
    %c0_20 = arith.constant 0 : index
    %c0_21 = arith.constant 0 : index
    %27 = vector.load %arg9[%c0_20, %c0_21] : memref<8x8xf32, #tpu.memory_space<vmem>>, vector<8x8xf32>
    tpu.vector_store %arg9[%c0_20, %c0_21], %26 {strides = array<i32>} : memref<8x8xf32, #tpu.memory_space<vmem>>, vector<8x8xf32>,
    return
  }
  func.func @transform_0(%arg0: i32) -> (i32, i32) {
    %c0_i32 = arith.constant 0 : i32
    %c0_i32_0 = arith.constant 0 : i32
    return %arg0, %c0_i32 : i32, i32
  }
  func.func @transform_1(%arg0: i32) -> (i32, i32) {
    %c0_i32 = arith.constant 0 : i32
    %c0_i32_0 = arith.constant 0 : i32
    return %arg0, %c0_i32 : i32, i32
  }
  func.func @transform_2(%arg0: i32) -> (i32, i32) {
    %c0_i32 = arith.constant 0 : i32
    %c0_i32_0 = arith.constant 0 : i32
    %c0_i32_1 = arith.constant 0 : i32
    return %c0_i32, %c0_i32_0 : i32, i32
  }
  func.func @transform_3(%arg0: i32) -> (i32, i32) {
    %c0_i32 = arith.constant 0 : i32
    %c0_i32_0 = arith.constant 0 : i32
    %c0_i32_1 = arith.constant 0 : i32
    return %c0_i32, %c0_i32_0 : i32, i32
  }
  func.func @transform_4(%arg0: i32) -> (i32, i32) {
    %c0_i32 = arith.constant 0 : i32
    %c0_i32_0 = arith.constant 0 : i32
    %c0_i32_1 = arith.constant 0 : i32
    return %c0_i32, %c0_i32_0 : i32, i32
  }
  func.func @transform_5(%arg0: i32) -> (i32, i32) {
    %c0_i32 = arith.constant 0 : i32
    %c0_i32_0 = arith.constant 0 : i32
    %c0_i32_1 = arith.constant 0 : i32
    return %c0_i32, %c0_i32_0 : i32, i32
  }
  func.func @transform_6(%arg0: i32) -> (i32, i32) {
    %c0_i32 = arith.constant 0 : i32
    %c0_i32_0 = arith.constant 0 : i32
    %c0_i32_1 = arith.constant 0 : i32
    return %c0_i32, %c0_i32_0 : i32, i32
  }
  func.func @transform_7(%arg0: i32) -> (i32, i32) {
    %c0_i32 = arith.constant 0 : i32
    %c0_i32_0 = arith.constant 0 : i32
    %c0_i32_1 = arith.constant 0 : i32
    return %c0_i32, %c0_i32_0 : i32, i32
  }
  func.func @transform_8(%arg0: i32) -> (i32, i32) {
    %c0_i32 = arith.constant 0 : i32
    %c0_i32_0 = arith.constant 0 : i32
    return %arg0, %c0_i32 : i32, i32
  }
}

</mosaic_0001>

<llo_original>
// kernel: tpu_custom_call.1
$region0: #{tpu_custom_call.1}
  #allocation0 [shape = 'u32[]', space=smem, size = 0x4, offset = 0x4, fixed_abs, tag = 'smem constant byte address 0x4 - core index']
  #allocation1 [shape = 'u32[144,128]{1,0:T(1,128)}', space=vmem, size = 0x12000, scoped, tag = 'internal scratch']
  %s0 = inlined_call_operand.vmem [shape: f32[16,128], index: 0, kind: input, shape index: {}]
  %s1 = inlined_call_operand.vmem [shape: f32[8,128], index: 1, kind: input, shape index: {}]
  %s2 = inlined_call_operand.vmem [shape: f32[128,128], index: 2, kind: input, shape index: {}]
  %s3 = inlined_call_operand.vmem [shape: f32[1,128], index: 3, kind: input, shape index: {}]
  %s4 = inlined_call_operand.vmem [shape: f32[16,8], index: 4, kind: input, shape index: {}]
  %s5 = inlined_call_operand.vmem [shape: f32[128,8], index: 5, kind: input, shape index: {}]
  %s6 = inlined_call_operand.vmem [shape: f32[16,8], index: 6, kind: input, shape index: {}]
  %s7 = inlined_call_operand.vmem [shape: f32[8,16], index: 7, kind: input, shape index: {}]
  %s8 = inlined_call_operand.hbm [shape: f32[8,8], index: 8, kind: output, shape index: {}]
  %s9 = sld [smem:[#allocation0]]
  $region42: #{tpu_custom_call.1} parent=0
    _
  %s11 = ssub.s32 1, %s9
  %s12 = scalar_select 0, %s11, %s9
  $region1: #{tpu_custom_call.1} parent=0
    #allocation2 [shape = 'u8[4096]{0}', space=vmem, size = 0x1000, scoped, tag = 'output window, operand 0, single buffered']
    #allocation3 [shape = 's32[1]{0}', space=sflag, size = 0x4, scoped, tag = 'scoped memory for tpu_custom_call.1']
    %13 = vsyncpa [#allocation3], 0
    // Predicated region
    $region2: #{tpu_custom_call.1} parent=1 // pred_check
      _
    $region3: #{tpu_custom_call.1} parent=1 // pred_check_branch
      %15 = sbr.rel (0) target = $region5
    $region4: #{tpu_custom_call.1} parent=1 // pred_region
      _
    $region5: #{tpu_custom_call.1} parent=1 // pred_fallthru
      _
    // Predicated region
    $region6: #{tpu_custom_call.1} parent=1 // pred_check
      _
    $region7: #{tpu_custom_call.1} parent=1 // pred_check_branch
      %17 = sbr.rel (0) target = $region9
    $region8: #{tpu_custom_call.1} parent=1 // pred_region
      _
    $region9: #{tpu_custom_call.1} parent=1 // pred_fallthru
      _
    // Predicated region
    $region10: #{tpu_custom_call.1} parent=1 // pred_check
      _
    $region11: #{tpu_custom_call.1} parent=1 // pred_check_branch
      %19 = sbr.rel (0) target = $region13
    $region12: #{tpu_custom_call.1} parent=1 // pred_region
      _
    $region13: #{tpu_custom_call.1} parent=1 // pred_fallthru
      _
    // Predicated region
    $region14: #{tpu_custom_call.1} parent=1 // pred_check
      _
    $region15: #{tpu_custom_call.1} parent=1 // pred_check_branch
      %21 = sbr.rel (0) target = $region17
    $region16: #{tpu_custom_call.1} parent=1 // pred_region
      _
    $region17: #{tpu_custom_call.1} parent=1 // pred_fallthru
      _
    // Predicated region
    $region18: #{tpu_custom_call.1} parent=1 // pred_check
      _
    $region19: #{tpu_custom_call.1} parent=1 // pred_check_branch
      %23 = sbr.rel (0) target = $region21
    $region20: #{tpu_custom_call.1} parent=1 // pred_region
      _
    $region21: #{tpu_custom_call.1} parent=1 // pred_fallthru
      _
    // Predicated region
    $region22: #{tpu_custom_call.1} parent=1 // pred_check
      _
    $region23: #{tpu_custom_call.1} parent=1 // pred_check_branch
      %25 = sbr.rel (0) target = $region25
    $region24: #{tpu_custom_call.1} parent=1 // pred_region
      _
    $region25: #{tpu_custom_call.1} parent=1 // pred_fallthru
      _
    // Predicated region
    $region26: #{tpu_custom_call.1} parent=1 // pred_check
      _
    $region27: #{tpu_custom_call.1} parent=1 // pred_check_branch
      %27 = sbr.rel (0) target = $region29
    $region28: #{tpu_custom_call.1} parent=1 // pred_region
      _
    $region29: #{tpu_custom_call.1} parent=1 // pred_fallthru
      _
    // Predicated region
    $region30: #{tpu_custom_call.1} parent=1 // pred_check
      _
    $region31: #{tpu_custom_call.1} parent=1 // pred_check_branch
      %29 = sbr.rel (0) target = $region33
    $region32: #{tpu_custom_call.1} parent=1 // pred_region
      _
    $region33: #{tpu_custom_call.1} parent=1 // pred_fallthru
      _
    %v30 = vld [vmem:[%s0] sm:$0xff]
    %v31 = vld [vmem:[%s0 + $0x8] sm:$0xff]
    %v32 = vld [vmem:[%s2] sm:$0xff]
    %v33 = vld [vmem:[%s2 + $0x8] sm:$0xff]
    %v34 = vld [vmem:[%s2 + $0x10] sm:$0xff]
    %v35 = vld [vmem:[%s2 + $0x18] sm:$0xff]
    %v36 = vld [vmem:[%s2 + $0x20] sm:$0xff]
    %v37 = vld [vmem:[%s2 + $0x28] sm:$0xff]
    %v38 = vld [vmem:[%s2 + $0x30] sm:$0xff]
    %v39 = vld [vmem:[%s2 + $0x38] sm:$0xff]
    %v40 = vld [vmem:[%s2 + $0x40] sm:$0xff]
    %v41 = vld [vmem:[%s2 + $0x48] sm:$0xff]
    %v42 = vld [vmem:[%s2 + $0x50] sm:$0xff]
    %v43 = vld [vmem:[%s2 + $0x58] sm:$0xff]
    %v44 = vld [vmem:[%s2 + $0x60] sm:$0xff]
    %v45 = vld [vmem:[%s2 + $0x68] sm:$0xff]
    %v46 = vld [vmem:[%s2 + $0x70] sm:$0xff]
    %v47 = vld [vmem:[%s2 + $0x78] sm:$0xff]
    %v48 = vld [vmem:[%s3] sm:$0x1]
    %v50 = vlaneseq
    %v51 = vshrl.u32 %v50, 7
    %v52 = vsub.s32 0, %v51
    %v53 = vrot.slane %v48, %v52
    %55 = vmatprep.subr.mxu0 0.0
    %v56 = vand.u32 %v32, 4294901760
    %57 = vmatpush1.msra.mxu0 %v56
    %58 = vmatprep.subr.mxu0 0.0
    %v59 = vand.u32 %v33, 4294901760
    %60 = vmatpush1.msra.mxu0 %v59
    %61 = vmatprep.subr.mxu0 0.0
    %v62 = vand.u32 %v34, 4294901760
    %63 = vmatpush1.msra.mxu0 %v62
    %64 = vmatprep.subr.mxu0 0.0
    %v65 = vand.u32 %v35, 4294901760
    %66 = vmatpush1.msra.mxu0 %v65
    %67 = vmatprep.subr.mxu0 0.0
    %v68 = vand.u32 %v36, 4294901760
    %69 = vmatpush1.msra.mxu0 %v68
    %70 = vmatprep.subr.mxu0 0.0
    %v71 = vand.u32 %v37, 4294901760
    %72 = vmatpush1.msra.mxu0 %v71
    %73 = vmatprep.subr.mxu0 0.0
    %v74 = vand.u32 %v38, 4294901760
    %75 = vmatpush1.msra.mxu0 %v74
    %76 = vmatprep.subr.mxu0 0.0
    %v77 = vand.u32 %v39, 4294901760
    %78 = vmatpush1.msra.mxu0 %v77
    %79 = vmatprep.subr.mxu0 0.0
    %v80 = vand.u32 %v40, 4294901760
    %81 = vmatpush1.msra.mxu0 %v80
    %82 = vmatprep.subr.mxu0 0.0
    %v83 = vand.u32 %v41, 4294901760
    %84 = vmatpush1.msra.mxu0 %v83
    %85 = vmatprep.subr.mxu0 0.0
    %v86 = vand.u32 %v42, 4294901760
    %87 = vmatpush1.msra.mxu0 %v86
    %88 = vmatprep.subr.mxu0 0.0
    %v89 = vand.u32 %v43, 4294901760
    %90 = vmatpush1.msra.mxu0 %v89
    %91 = vmatprep.subr.mxu0 0.0
    %v92 = vand.u32 %v44, 4294901760
    %93 = vmatpush1.msra.mxu0 %v92
    %94 = vmatprep.subr.mxu0 0.0
    %v95 = vand.u32 %v45, 4294901760
    %96 = vmatpush1.msra.mxu0 %v95
    %97 = vmatprep.subr.mxu0 0.0
    %v98 = vand.u32 %v46, 4294901760
    %99 = vmatpush1.msra.mxu0 %v98
    %100 = vmatprep.subr.mxu0 0.0
    %v101 = vand.u32 %v47, 4294901760
    %102 = vmatpush1.msra.mxu0 %v101
    %103 = vmatprep.subr.mxu0 0.0
    %104 = vmatpush1.msra.mxu0 0.0
    %105 = vmatprep.subr.mxu0 0.0
    %106 = vmatpush1.msra.mxu0 0.0
    %107 = vmatprep.subr.mxu0 0.0
    %108 = vmatpush1.msra.mxu0 0.0
    %109 = vmatprep.subr.mxu0 0.0
    %110 = vmatpush1.msra.mxu0 0.0
    %111 = vmatprep.subr.mxu0 0.0
    %112 = vmatpush1.msra.mxu0 0.0
    %113 = vmatprep.subr.mxu0 0.0
    %114 = vmatpush1.msra.mxu0 0.0
    %115 = vmatprep.subr.mxu0 0.0
    %116 = vmatpush1.msra.mxu0 0.0
    %117 = vmatprep.subr.mxu0 0.0
    %118 = vmatpush1.msra.mxu0 0.0
    %119 = vmatprep.subr.mxu0 0.0
    %120 = vmatpush1.msra.mxu0 0.0
    %121 = vmatprep.subr.mxu0 0.0
    %122 = vmatpush1.msra.mxu0 0.0
    %123 = vmatprep.subr.mxu0 0.0
    %124 = vmatpush1.msra.mxu0 0.0
    %125 = vmatprep.subr.mxu0 0.0
    %126 = vmatpush1.msra.mxu0 0.0
    %127 = vmatprep.subr.mxu0 0.0
    %128 = vmatpush1.msra.mxu0 0.0
    %129 = vmatprep.subr.mxu0 0.0
    %130 = vmatpush1.msra.mxu0 0.0
    %131 = vmatprep.subr.mxu0 0.0
    %132 = vmatpush1.msra.mxu0 0.0
    %133 = vmatprep.subr.mxu0 0.0
    %134 = vmatpush1.msra.mxu0 0.0
    %135 = vmatprep.mubr.f32.mxu0 0.0
    %v136 = vand.u32 %v30, 4294901760
    %v137 = vsub.f32 %v30, %v136
    %v138 = vand.u32 %v137, 4294901760
    %v139 = vsub.f32 %v137, %v138
    %v140 = vand.u32 %v139, 4294901760
    %141 = vmatmul.mubr.f32.gmra.mrb[0].mxu0 %v140
    %v142 = vpop.f32.mrb[0].mxu0
    %v143 = vadd.f32 %v53, %v142
    %v144 = vpop.f32.mrb[0].mxu0
    %145 = vmatprep.mubr.f32.mxu0 0.0
    %v146 = vand.u32 %v31, 4294901760
    %v147 = vsub.f32 %v31, %v146
    %v148 = vand.u32 %v147, 4294901760
    %v149 = vsub.f32 %v147, %v148
    %v150 = vand.u32 %v149, 4294901760
    %151 = vmatmul.mubr.f32.gmra.mrb[0].mxu0 %v150
    %v152 = vpop.f32.mrb[0].mxu0
    %v153 = vadd.f32 %v53, %v152
    %v154 = vpop.f32.mrb[0].mxu0
    %155 = vdwg.mxu0
    %156 = vmatprep.subr.mxu0 0.0
    %v157 = vand.u32 %v32, 4294901760
    %v158 = vsub.f32 %v32, %v157
    %v159 = vand.u32 %v158, 4294901760
    %v160 = vsub.f32 %v158, %v159
    %v161 = vand.u32 %v160, 4294901760
    %162 = vmatpush1.msra.mxu0 %v161
    %163 = vmatprep.subr.mxu0 0.0
    %v164 = vand.u32 %v33, 4294901760
    %v165 = vsub.f32 %v33, %v164
    %v166 = vand.u32 %v165, 4294901760
    %v167 = vsub.f32 %v165, %v166
    %v168 = vand.u32 %v167, 4294901760
    %169 = vmatpush1.msra.mxu0 %v168
    %170 = vmatprep.subr.mxu0 0.0
    %v171 = vand.u32 %v34, 4294901760
    %v172 = vsub.f32 %v34, %v171
    %v173 = vand.u32 %v172, 4294901760
    %v174 = vsub.f32 %v172, %v173
    %v175 = vand.u32 %v174, 4294901760
    %176 = vmatpush1.msra.mxu0 %v175
    %177 = vmatprep.subr.mxu0 0.0
    %v178 = vand.u32 %v35, 4294901760
    %v179 = vsub.f32 %v35, %v178
    %v180 = vand.u32 %v179, 4294901760
    %v181 = vsub.f32 %v179, %v180
    %v182 = vand.u32 %v181, 4294901760
    %183 = vmatpush1.msra.mxu0 %v182
    %184 = vmatprep.subr.mxu0 0.0
    %v185 = vand.u32 %v36, 4294901760
    %v186 = vsub.f32 %v36, %v185
    %v187 = vand.u32 %v186, 4294901760
    %v188 = vsub.f32 %v186, %v187
    %v189 = vand.u32 %v188, 4294901760
    %190 = vmatpush1.msra.mxu0 %v189
    %191 = vmatprep.subr.mxu0 0.0
    %v192 = vand.u32 %v37, 4294901760
    %v193 = vsub.f32 %v37, %v192
    %v194 = vand.u32 %v193, 4294901760
    %v195 = vsub.f32 %v193, %v194
    %v196 = vand.u32 %v195, 4294901760
    %197 = vmatpush1.msra.mxu0 %v196
    %198 = vmatprep.subr.mxu0 0.0
    %v199 = vand.u32 %v38, 4294901760
    %v200 = vsub.f32 %v38, %v199
    %v201 = vand.u32 %v200, 4294901760
    %v202 = vsub.f32 %v200, %v201
    %v203 = vand.u32 %v202, 4294901760
    %204 = vmatpush1.msra.mxu0 %v203
    %205 = vmatprep.subr.mxu0 0.0
    %v206 = vand.u32 %v39, 4294901760
    %v207 = vsub.f32 %v39, %v206
    %v208 = vand.u32 %v207, 4294901760
    %v209 = vsub.f32 %v207, %v208
    %v210 = vand.u32 %v209, 4294901760
    %211 = vmatpush1.msra.mxu0 %v210
    %212 = vmatprep.subr.mxu0 0.0
    %v213 = vand.u32 %v40, 4294901760
    %v214 = vsub.f32 %v40, %v213
    %v215 = vand.u32 %v214, 4294901760
    %v216 = vsub.f32 %v214, %v215
    %v217 = vand.u32 %v216, 4294901760
    %218 = vmatpush1.msra.mxu0 %v217
    %219 = vmatprep.subr.mxu0 0.0
    %v220 = vand.u32 %v41, 4294901760
    %v221 = vsub.f32 %v41, %v220
    %v222 = vand.u32 %v221, 4294901760
    %v223 = vsub.f32 %v221, %v222
    %v224 = vand.u32 %v223, 4294901760
    %225 = vmatpush1.msra.mxu0 %v224
    %226 = vmatprep.subr.mxu0 0.0
    %v227 = vand.u32 %v42, 4294901760
    %v228 = vsub.f32 %v42, %v227
    %v229 = vand.u32 %v228, 4294901760
    %v230 = vsub.f32 %v228, %v229
    %v231 = vand.u32 %v230, 4294901760
    %232 = vmatpush1.msra.mxu0 %v231
    %233 = vmatprep.subr.mxu0 0.0
    %v234 = vand.u32 %v43, 4294901760
    %v235 = vsub.f32 %v43, %v234
    %v236 = vand.u32 %v235, 4294901760
    %v237 = vsub.f32 %v235, %v236
    %v238 = vand.u32 %v237, 4294901760
    %239 = vmatpush1.msra.mxu0 %v238
    %240 = vmatprep.subr.mxu0 0.0
    %v241 = vand.u32 %v44, 4294901760
    %v242 = vsub.f32 %v44, %v241
    %v243 = vand.u32 %v242, 4294901760
    %v244 = vsub.f32 %v242, %v243
    %v245 = vand.u32 %v244, 4294901760
    %246 = vmatpush1.msra.mxu0 %v245
    %247 = vmatprep.subr.mxu0 0.0
    %v248 = vand.u32 %v45, 4294901760
    %v249 = vsub.f32 %v45, %v248
    %v250 = vand.u32 %v249, 4294901760
    %v251 = vsub.f32 %v249, %v250
    %v252 = vand.u32 %v251, 4294901760
    %253 = vmatpush1.msra.mxu0 %v252
    %254 = vmatprep.subr.mxu0 0.0
    %v255 = vand.u32 %v46, 4294901760
    %v256 = vsub.f32 %v46, %v255
    %v257 = vand.u32 %v256, 4294901760
    %v258 = vsub.f32 %v256, %v257
    %v259 = vand.u32 %v258, 4294901760
    %260 = vmatpush1.msra.mxu0 %v259
    %261 = vmatprep.subr.mxu0 0.0
    %v262 = vand.u32 %v47, 4294901760
    %v263 = vsub.f32 %v47, %v262
    %v264 = vand.u32 %v263, 4294901760
    %v265 = vsub.f32 %v263, %v264
    %v266 = vand.u32 %v265, 4294901760
    %267 = vmatpush1.msra.mxu0 %v266
    %268 = vmatprep.subr.mxu0 0.0
    %269 = vmatpush1.msra.mxu0 0.0
    %270 = vmatprep.subr.mxu0 0.0
    %271 = vmatpush1.msra.mxu0 0.0
    %272 = vmatprep.subr.mxu0 0.0
    %273 = vmatpush1.msra.mxu0 0.0
    %274 = vmatprep.subr.mxu0 0.0
    %275 = vmatpush1.msra.mxu0 0.0
    %276 = vmatprep.subr.mxu0 0.0
    %277 = vmatpush1.msra.mxu0 0.0
    %278 = vmatprep.subr.mxu0 0.0
    %279 = vmatpush1.msra.mxu0 0.0
    %280 = vmatprep.subr.mxu0 0.0
    %281 = vmatpush1.msra.mxu0 0.0
    %282 = vmatprep.subr.mxu0 0.0
    %283 = vmatpush1.msra.mxu0 0.0
    %284 = vmatprep.subr.mxu0 0.0
    %285 = vmatpush1.msra.mxu0 0.0
    %286 = vmatprep.subr.mxu0 0.0
    %287 = vmatpush1.msra.mxu0 0.0
    %288 = vmatprep.subr.mxu0 0.0
    %289 = vmatpush1.msra.mxu0 0.0
    %290 = vmatprep.subr.mxu0 0.0
    %291 = vmatpush1.msra.mxu0 0.0
    %292 = vmatprep.subr.mxu0 0.0
    %293 = vmatpush1.msra.mxu0 0.0
    %294 = vmatprep.subr.mxu0 0.0
    %295 = vmatpush1.msra.mxu0 0.0
    %296 = vmatprep.subr.mxu0 0.0
    %297 = vmatpush1.msra.mxu0 0.0
    %298 = vmatprep.subr.mxu0 0.0
    %299 = vmatpush1.msra.mxu0 0.0
    %300 = vmatprep.mubr.f32.mxu0 0.0
    %v301 = vand.u32 %v30, 4294901760
    %302 = vmatmul.mubr.f32.gmra.mrb[0].mxu0 %v301
    %v303 = vpop.f32.mrb[0].mxu0
    %v304 = vadd.f32 %v143, %v303
    %v305 = vpop.f32.mrb[0].mxu0
    %306 = vmatprep.mubr.f32.mxu0 0.0
    %v307 = vand.u32 %v31, 4294901760
    %308 = vmatmul.mubr.f32.gmra.mrb[0].mxu0 %v307
    %v309 = vpop.f32.mrb[0].mxu0
    %v310 = vadd.f32 %v153, %v309
    %v311 = vpop.f32.mrb[0].mxu0
    %312 = vdwg.mxu0
    %313 = vmatprep.subr.mxu0 0.0
    %v314 = vand.u32 %v32, 4294901760
    %v315 = vsub.f32 %v32, %v314
    %316 = vmatpush1.msra.mxu0 %v315
    %317 = vmatprep.subr.mxu0 0.0
    %v318 = vand.u32 %v33, 4294901760
    %v319 = vsub.f32 %v33, %v318
    %320 = vmatpush1.msra.mxu0 %v319
    %321 = vmatprep.subr.mxu0 0.0
    %v322 = vand.u32 %v34, 4294901760
    %v323 = vsub.f32 %v34, %v322
    %324 = vmatpush1.msra.mxu0 %v323
    %325 = vmatprep.subr.mxu0 0.0
    %v326 = vand.u32 %v35, 4294901760
    %v327 = vsub.f32 %v35, %v326
    %328 = vmatpush1.msra.mxu0 %v327
    %329 = vmatprep.subr.mxu0 0.0
    %v330 = vand.u32 %v36, 4294901760
    %v331 = vsub.f32 %v36, %v330
    %332 = vmatpush1.msra.mxu0 %v331
    %333 = vmatprep.subr.mxu0 0.0
    %v334 = vand.u32 %v37, 4294901760
    %v335 = vsub.f32 %v37, %v334
    %336 = vmatpush1.msra.mxu0 %v335
    %337 = vmatprep.subr.mxu0 0.0
    %v338 = vand.u32 %v38, 4294901760
    %v339 = vsub.f32 %v38, %v338
    %340 = vmatpush1.msra.mxu0 %v339
    %341 = vmatprep.subr.mxu0 0.0
    %v342 = vand.u32 %v39, 4294901760
    %v343 = vsub.f32 %v39, %v342
    %344 = vmatpush1.msra.mxu0 %v343
    %345 = vmatprep.subr.mxu0 0.0
    %v346 = vand.u32 %v40, 4294901760
    %v347 = vsub.f32 %v40, %v346
    %348 = vmatpush1.msra.mxu0 %v347
    %349 = vmatprep.subr.mxu0 0.0
    %v350 = vand.u32 %v41, 4294901760
    %v351 = vsub.f32 %v41, %v350
    %352 = vmatpush1.msra.mxu0 %v351
    %353 = vmatprep.subr.mxu0 0.0
    %v354 = vand.u32 %v42, 4294901760
    %v355 = vsub.f32 %v42, %v354
    %356 = vmatpush1.msra.mxu0 %v355
    %357 = vmatprep.subr.mxu0 0.0
    %v358 = vand.u32 %v43, 4294901760
    %v359 = vsub.f32 %v43, %v358
    %360 = vmatpush1.msra.mxu0 %v359
    %361 = vmatprep.subr.mxu0 0.0
    %v362 = vand.u32 %v44, 4294901760
    %v363 = vsub.f32 %v44, %v362
    %364 = vmatpush1.msra.mxu0 %v363
    %365 = vmatprep.subr.mxu0 0.0
    %v366 = vand.u32 %v45, 4294901760
    %v367 = vsub.f32 %v45, %v366
    %368 = vmatpush1.msra.mxu0 %v367
    %369 = vmatprep.subr.mxu0 0.0
    %v370 = vand.u32 %v46, 4294901760
    %v371 = vsub.f32 %v46, %v370
    %372 = vmatpush1.msra.mxu0 %v371
    %373 = vmatprep.subr.mxu0 0.0
    %v374 = vand.u32 %v47, 4294901760
    %v375 = vsub.f32 %v47, %v374
    %376 = vmatpush1.msra.mxu0 %v375
    %377 = vmatprep.subr.mxu0 0.0
    %378 = vmatpush1.msra.mxu0 0.0
    %379 = vmatprep.subr.mxu0 0.0
    %380 = vmatpush1.msra.mxu0 0.0
    %381 = vmatprep.subr.mxu0 0.0
    %382 = vmatpush1.msra.mxu0 0.0
    %383 = vmatprep.subr.mxu0 0.0
    %384 = vmatpush1.msra.mxu0 0.0
    %385 = vmatprep.subr.mxu0 0.0
    %386 = vmatpush1.msra.mxu0 0.0
    %387 = vmatprep.subr.mxu0 0.0
    %388 = vmatpush1.msra.mxu0 0.0
    %389 = vmatprep.subr.mxu0 0.0
    %390 = vmatpush1.msra.mxu0 0.0
    %391 = vmatprep.subr.mxu0 0.0
    %392 = vmatpush1.msra.mxu0 0.0
    %393 = vmatprep.subr.mxu0 0.0
    %394 = vmatpush1.msra.mxu0 0.0
    %395 = vmatprep.subr.mxu0 0.0
    %396 = vmatpush1.msra.mxu0 0.0
    %397 = vmatprep.subr.mxu0 0.0
    %398 = vmatpush1.msra.mxu0 0.0
    %399 = vmatprep.subr.mxu0 0.0
    %400 = vmatpush1.msra.mxu0 0.0
    %401 = vmatprep.subr.mxu0 0.0
    %402 = vmatpush1.msra.mxu0 0.0
    %403 = vmatprep.subr.mxu0 0.0
    %404 = vmatpush1.msra.mxu0 0.0
    %405 = vmatprep.subr.mxu0 0.0
    %406 = vmatpush1.msra.mxu0 0.0
    %407 = vmatprep.subr.mxu0 0.0
    %408 = vmatpush1.msra.mxu0 0.0
    %409 = vmatprep.mubr.f32.mxu0 0.0
    %v410 = vand.u32 %v30, 4294901760
    %v411 = vsub.f32 %v30, %v410
    %412 = vmatmul.mubr.f32.gmra.mrb[0].mxu0 %v411
    %v413 = vpop.f32.mrb[0].mxu0
    %v414 = vadd.f32 %v304, %v413
    %v415 = vpop.f32.mrb[0].mxu0
    %416 = vmatprep.mubr.f32.mxu0 0.0
    %v417 = vand.u32 %v31, 4294901760
    %v418 = vsub.f32 %v31, %v417
    %419 = vmatmul.mubr.f32.gmra.mrb[0].mxu0 %v418
    %v420 = vpop.f32.mrb[0].mxu0
    %v421 = vadd.f32 %v310, %v420
    %v422 = vpop.f32.mrb[0].mxu0
    %423 = vdwg.mxu0
    %424 = vmatprep.subr.mxu0 0.0
    %v425 = vand.u32 %v32, 4294901760
    %426 = vmatpush1.msra.mxu0 %v425
    %427 = vmatprep.subr.mxu0 0.0
    %v428 = vand.u32 %v33, 4294901760
    %429 = vmatpush1.msra.mxu0 %v428
    %430 = vmatprep.subr.mxu0 0.0
    %v431 = vand.u32 %v34, 4294901760
    %432 = vmatpush1.msra.mxu0 %v431
    %433 = vmatprep.subr.mxu0 0.0
    %v434 = vand.u32 %v35, 4294901760
    %435 = vmatpush1.msra.mxu0 %v434
    %436 = vmatprep.subr.mxu0 0.0
    %v437 = vand.u32 %v36, 4294901760
    %438 = vmatpush1.msra.mxu0 %v437
    %439 = vmatprep.subr.mxu0 0.0
    %v440 = vand.u32 %v37, 4294901760
    %441 = vmatpush1.msra.mxu0 %v440
    %442 = vmatprep.subr.mxu0 0.0
    %v443 = vand.u32 %v38, 4294901760
    %444 = vmatpush1.msra.mxu0 %v443
    %445 = vmatprep.subr.mxu0 0.0
    %v446 = vand.u32 %v39, 4294901760
    %447 = vmatpush1.msra.mxu0 %v446
    %448 = vmatprep.subr.mxu0 0.0
    %v449 = vand.u32 %v40, 4294901760
    %450 = vmatpush1.msra.mxu0 %v449
    %451 = vmatprep.subr.mxu0 0.0
    %v452 = vand.u32 %v41, 4294901760
    %453 = vmatpush1.msra.mxu0 %v452
    %454 = vmatprep.subr.mxu0 0.0
    %v455 = vand.u32 %v42, 4294901760
    %456 = vmatpush1.msra.mxu0 %v455
    %457 = vmatprep.subr.mxu0 0.0
    %v458 = vand.u32 %v43, 4294901760
    %459 = vmatpush1.msra.mxu0 %v458
    %460 = vmatprep.subr.mxu0 0.0
    %v461 = vand.u32 %v44, 4294901760
    %462 = vmatpush1.msra.mxu0 %v461
    %463 = vmatprep.subr.mxu0 0.0
    %v464 = vand.u32 %v45, 4294901760
    %465 = vmatpush1.msra.mxu0 %v464
    %466 = vmatprep.subr.mxu0 0.0
    %v467 = vand.u32 %v46, 4294901760
    %468 = vmatpush1.msra.mxu0 %v467
    %469 = vmatprep.subr.mxu0 0.0
    %v470 = vand.u32 %v47, 4294901760
    %471 = vmatpush1.msra.mxu0 %v470
    %472 = vmatprep.subr.mxu0 0.0
    %473 = vmatpush1.msra.mxu0 0.0
    %474 = vmatprep.subr.mxu0 0.0
    %475 = vmatpush1.msra.mxu0 0.0
    %476 = vmatprep.subr.mxu0 0.0
    %477 = vmatpush1.msra.mxu0 0.0
    %478 = vmatprep.subr.mxu0 0.0
    %479 = vmatpush1.msra.mxu0 0.0
    %480 = vmatprep.subr.mxu0 0.0
    %481 = vmatpush1.msra.mxu0 0.0
    %482 = vmatprep.subr.mxu0 0.0
    %483 = vmatpush1.msra.mxu0 0.0
    %484 = vmatprep.subr.mxu0 0.0
    %485 = vmatpush1.msra.mxu0 0.0
    %486 = vmatprep.subr.mxu0 0.0
    %487 = vmatpush1.msra.mxu0 0.0
    %488 = vmatprep.subr.mxu0 0.0
    %489 = vmatpush1.msra.mxu0 0.0
    %490 = vmatprep.subr.mxu0 0.0
    %491 = vmatpush1.msra.mxu0 0.0
    %492 = vmatprep.subr.mxu0 0.0
    %493 = vmatpush1.msra.mxu0 0.0
    %494 = vmatprep.subr.mxu0 0.0
    %495 = vmatpush1.msra.mxu0 0.0
    %496 = vmatprep.subr.mxu0 0.0
    %497 = vmatpush1.msra.mxu0 0.0
    %498 = vmatprep.subr.mxu0 0.0
    %499 = vmatpush1.msra.mxu0 0.0
    %500 = vmatprep.subr.mxu0 0.0
    %501 = vmatpush1.msra.mxu0 0.0
    %502 = vmatprep.subr.mxu0 0.0
    %503 = vmatpush1.msra.mxu0 0.0
    %504 = vmatprep.mubr.f32.mxu0 0.0
    %v505 = vand.u32 %v30, 4294901760
    %v506 = vsub.f32 %v30, %v505
    %v507 = vand.u32 %v506, 4294901760
    %508 = vmatmul.mubr.f32.gmra.mrb[0].mxu0 %v507
    %v509 = vpop.f32.mrb[0].mxu0
    %v510 = vadd.f32 %v414, %v509
    %v511 = vpop.f32.mrb[0].mxu0
    %512 = vmatprep.mubr.f32.mxu0 0.0
    %v513 = vand.u32 %v31, 4294901760
    %v514 = vsub.f32 %v31, %v513
    %v515 = vand.u32 %v514, 4294901760
    %516 = vmatmul.mubr.f32.gmra.mrb[0].mxu0 %v515
    %v517 = vpop.f32.mrb[0].mxu0
    %v518 = vadd.f32 %v421, %v517
    %v519 = vpop.f32.mrb[0].mxu0
    %520 = vdwg.mxu0
    %521 = vmatprep.subr.mxu0 0.0
    %v522 = vand.u32 %v32, 4294901760
    %v523 = vsub.f32 %v32, %v522
    %v524 = vand.u32 %v523, 4294901760
    %525 = vmatpush1.msra.mxu0 %v524
    %526 = vmatprep.subr.mxu0 0.0
    %v527 = vand.u32 %v33, 4294901760
    %v528 = vsub.f32 %v33, %v527
    %v529 = vand.u32 %v528, 4294901760
    %530 = vmatpush1.msra.mxu0 %v529
    %531 = vmatprep.subr.mxu0 0.0
    %v532 = vand.u32 %v34, 4294901760
    %v533 = vsub.f32 %v34, %v532
    %v534 = vand.u32 %v533, 4294901760
    %535 = vmatpush1.msra.mxu0 %v534
    %536 = vmatprep.subr.mxu0 0.0
    %v537 = vand.u32 %v35, 4294901760
    %v538 = vsub.f32 %v35, %v537
    %v539 = vand.u32 %v538, 4294901760
    %540 = vmatpush1.msra.mxu0 %v539
    %541 = vmatprep.subr.mxu0 0.0
    %v542 = vand.u32 %v36, 4294901760
    %v543 = vsub.f32 %v36, %v542
    %v544 = vand.u32 %v543, 4294901760
    %545 = vmatpush1.msra.mxu0 %v544
    %546 = vmatprep.subr.mxu0 0.0
    %v547 = vand.u32 %v37, 4294901760
    %v548 = vsub.f32 %v37, %v547
    %v549 = vand.u32 %v548, 4294901760
    %550 = vmatpush1.msra.mxu0 %v549
    %551 = vmatprep.subr.mxu0 0.0
    %v552 = vand.u32 %v38, 4294901760
    %v553 = vsub.f32 %v38, %v552
    %v554 = vand.u32 %v553, 4294901760
    %555 = vmatpush1.msra.mxu0 %v554
    %556 = vmatprep.subr.mxu0 0.0
    %v557 = vand.u32 %v39, 4294901760
    %v558 = vsub.f32 %v39, %v557
    %v559 = vand.u32 %v558, 4294901760
    %560 = vmatpush1.msra.mxu0 %v559
    %561 = vmatprep.subr.mxu0 0.0
    %v562 = vand.u32 %v40, 4294901760
    %v563 = vsub.f32 %v40, %v562
    %v564 = vand.u32 %v563, 4294901760
    %565 = vmatpush1.msra.mxu0 %v564
    %566 = vmatprep.subr.mxu0 0.0
    %v567 = vand.u32 %v41, 4294901760
    %v568 = vsub.f32 %v41, %v567
    %v569 = vand.u32 %v568, 4294901760
    %570 = vmatpush1.msra.mxu0 %v569
    %571 = vmatprep.subr.mxu0 0.0
    %v572 = vand.u32 %v42, 4294901760
    %v573 = vsub.f32 %v42, %v572
    %v574 = vand.u32 %v573, 4294901760
    %575 = vmatpush1.msra.mxu0 %v574
    %576 = vmatprep.subr.mxu0 0.0
    %v577 = vand.u32 %v43, 4294901760
    %v578 = vsub.f32 %v43, %v577
    %v579 = vand.u32 %v578, 4294901760
    %580 = vmatpush1.msra.mxu0 %v579
    %581 = vmatprep.subr.mxu0 0.0
    %v582 = vand.u32 %v44, 4294901760
    %v583 = vsub.f32 %v44, %v582
    %v584 = vand.u32 %v583, 4294901760
    %585 = vmatpush1.msra.mxu0 %v584
    %586 = vmatprep.subr.mxu0 0.0
    %v587 = vand.u32 %v45, 4294901760
    %v588 = vsub.f32 %v45, %v587
    %v589 = vand.u32 %v588, 4294901760
    %590 = vmatpush1.msra.mxu0 %v589
    %591 = vmatprep.subr.mxu0 0.0
    %v592 = vand.u32 %v46, 4294901760
    %v593 = vsub.f32 %v46, %v592
    %v594 = vand.u32 %v593, 4294901760
    %595 = vmatpush1.msra.mxu0 %v594
    %596 = vmatprep.subr.mxu0 0.0
    %v597 = vand.u32 %v47, 4294901760
    %v598 = vsub.f32 %v47, %v597
    %v599 = vand.u32 %v598, 4294901760
    %600 = vmatpush1.msra.mxu0 %v599
    %601 = vmatprep.subr.mxu0 0.0
    %602 = vmatpush1.msra.mxu0 0.0
    %603 = vmatprep.subr.mxu0 0.0
    %604 = vmatpush1.msra.mxu0 0.0
    %605 = vmatprep.subr.mxu0 0.0
    %606 = vmatpush1.msra.mxu0 0.0
    %607 = vmatprep.subr.mxu0 0.0
    %608 = vmatpush1.msra.mxu0 0.0
    %609 = vmatprep.subr.mxu0 0.0
    %610 = vmatpush1.msra.mxu0 0.0
    %611 = vmatprep.subr.mxu0 0.0
    %612 = vmatpush1.msra.mxu0 0.0
    %613 = vmatprep.subr.mxu0 0.0
    %614 = vmatpush1.msra.mxu0 0.0
    %615 = vmatprep.subr.mxu0 0.0
    %616 = vmatpush1.msra.mxu0 0.0
    %617 = vmatprep.subr.mxu0 0.0
    %618 = vmatpush1.msra.mxu0 0.0
    %619 = vmatprep.subr.mxu0 0.0
    %620 = vmatpush1.msra.mxu0 0.0
    %621 = vmatprep.subr.mxu0 0.0
    %622 = vmatpush1.msra.mxu0 0.0
    %623 = vmatprep.subr.mxu0 0.0
    %624 = vmatpush1.msra.mxu0 0.0
    %625 = vmatprep.subr.mxu0 0.0
    %626 = vmatpush1.msra.mxu0 0.0
    %627 = vmatprep.subr.mxu0 0.0
    %628 = vmatpush1.msra.mxu0 0.0
    %629 = vmatprep.subr.mxu0 0.0
    %630 = vmatpush1.msra.mxu0 0.0
    %631 = vmatprep.subr.mxu0 0.0
    %632 = vmatpush1.msra.mxu0 0.0
    %633 = vmatprep.mubr.f32.mxu0 0.0
    %v634 = vand.u32 %v30, 4294901760
    %635 = vmatmul.mubr.f32.gmra.mrb[0].mxu0 %v634
    %v636 = vpop.f32.mrb[0].mxu0
    %v637 = vadd.f32 %v510, %v636
    %v638 = vpop.f32.mrb[0].mxu0
    %639 = vmatprep.mubr.f32.mxu0 0.0
    %v640 = vand.u32 %v31, 4294901760
    %641 = vmatmul.mubr.f32.gmra.mrb[0].mxu0 %v640
    %v642 = vpop.f32.mrb[0].mxu0
    %v643 = vadd.f32 %v518, %v642
    %v644 = vpop.f32.mrb[0].mxu0
    %645 = vdwg.mxu0
    %646 = vmatprep.subr.mxu0 0.0
    %v647 = vand.u32 %v32, 4294901760
    %648 = vmatpush1.msra.mxu0 %v647
    %649 = vmatprep.subr.mxu0 0.0
    %v650 = vand.u32 %v33, 4294901760
    %651 = vmatpush1.msra.mxu0 %v650
    %652 = vmatprep.subr.mxu0 0.0
    %v653 = vand.u32 %v34, 4294901760
    %654 = vmatpush1.msra.mxu0 %v653
    %655 = vmatprep.subr.mxu0 0.0
    %v656 = vand.u32 %v35, 4294901760
    %657 = vmatpush1.msra.mxu0 %v656
    %658 = vmatprep.subr.mxu0 0.0
    %v659 = vand.u32 %v36, 4294901760
    %660 = vmatpush1.msra.mxu0 %v659
    %661 = vmatprep.subr.mxu0 0.0
    %v662 = vand.u32 %v37, 4294901760
    %663 = vmatpush1.msra.mxu0 %v662
    %664 = vmatprep.subr.mxu0 0.0
    %v665 = vand.u32 %v38, 4294901760
    %666 = vmatpush1.msra.mxu0 %v665
    %667 = vmatprep.subr.mxu0 0.0
    %v668 = vand.u32 %v39, 4294901760
    %669 = vmatpush1.msra.mxu0 %v668
    %670 = vmatprep.subr.mxu0 0.0
    %v671 = vand.u32 %v40, 4294901760
    %672 = vmatpush1.msra.mxu0 %v671
    %673 = vmatprep.subr.mxu0 0.0
    %v674 = vand.u32 %v41, 4294901760
    %675 = vmatpush1.msra.mxu0 %v674
    %676 = vmatprep.subr.mxu0 0.0
    %v677 = vand.u32 %v42, 4294901760
    %678 = vmatpush1.msra.mxu0 %v677
    %679 = vmatprep.subr.mxu0 0.0
    %v680 = vand.u32 %v43, 4294901760
    %681 = vmatpush1.msra.mxu0 %v680
    %682 = vmatprep.subr.mxu0 0.0
    %v683 = vand.u32 %v44, 4294901760
    %684 = vmatpush1.msra.mxu0 %v683
    %685 = vmatprep.subr.mxu0 0.0
    %v686 = vand.u32 %v45, 4294901760
    %687 = vmatpush1.msra.mxu0 %v686
    %688 = vmatprep.subr.mxu0 0.0
    %v689 = vand.u32 %v46, 4294901760
    %690 = vmatpush1.msra.mxu0 %v689
    %691 = vmatprep.subr.mxu0 0.0
    %v692 = vand.u32 %v47, 4294901760
    %693 = vmatpush1.msra.mxu0 %v692
    %694 = vmatprep.subr.mxu0 0.0
    %695 = vmatpush1.msra.mxu0 0.0
    %696 = vmatprep.subr.mxu0 0.0
    %697 = vmatpush1.msra.mxu0 0.0
    %698 = vmatprep.subr.mxu0 0.0
    %699 = vmatpush1.msra.mxu0 0.0
    %700 = vmatprep.subr.mxu0 0.0
    %701 = vmatpush1.msra.mxu0 0.0
    %702 = vmatprep.subr.mxu0 0.0
    %703 = vmatpush1.msra.mxu0 0.0
    %704 = vmatprep.subr.mxu0 0.0
    %705 = vmatpush1.msra.mxu0 0.0
    %706 = vmatprep.subr.mxu0 0.0
    %707 = vmatpush1.msra.mxu0 0.0
    %708 = vmatprep.subr.mxu0 0.0
    %709 = vmatpush1.msra.mxu0 0.0
    %710 = vmatprep.subr.mxu0 0.0
    %711 = vmatpush1.msra.mxu0 0.0
    %712 = vmatprep.subr.mxu0 0.0
    %713 = vmatpush1.msra.mxu0 0.0
    %714 = vmatprep.subr.mxu0 0.0
    %715 = vmatpush1.msra.mxu0 0.0
    %716 = vmatprep.subr.mxu0 0.0
    %717 = vmatpush1.msra.mxu0 0.0
    %718 = vmatprep.subr.mxu0 0.0
    %719 = vmatpush1.msra.mxu0 0.0
    %720 = vmatprep.subr.mxu0 0.0
    %721 = vmatpush1.msra.mxu0 0.0
    %722 = vmatprep.subr.mxu0 0.0
    %723 = vmatpush1.msra.mxu0 0.0
    %724 = vmatprep.subr.mxu0 0.0
    %725 = vmatpush1.msra.mxu0 0.0
    %726 = vmatprep.mubr.f32.mxu0 0.0
    %v727 = vand.u32 %v30, 4294901760
    %728 = vmatmul.mubr.f32.gmra.mrb[0].mxu0 %v727
    %v729 = vpop.f32.mrb[0].mxu0
    %v730 = vadd.f32 %v637, %v729
    %v731 = vpop.f32.mrb[0].mxu0
    %732 = vmatprep.mubr.f32.mxu0 0.0
    %v733 = vand.u32 %v31, 4294901760
    %734 = vmatmul.mubr.f32.gmra.mrb[0].mxu0 %v733
    %v735 = vpop.f32.mrb[0].mxu0
    %v736 = vadd.f32 %v643, %v735
    %v737 = vpop.f32.mrb[0].mxu0
    %738 = vdwg.mxu0
    %v739 = vtanh.pop %v730
    %v740 = vtanh.pop %v736
    %v741 = vld [vmem:[%s4] sm:$0xff]
    %v742 = vld [vmem:[%s4 + $0x8] sm:$0xff]
    %v743 = vld [vmem:[%s1] sm:$0xff]
    %vm744 = vcmask 64512
    %v746 = vsel %vm744, %v741, 0
    %v749 = vsel %vm744, %v742, 0
    %751 = vmatprep.subr.mxu0 0.0
    %v752 = vand.u32 %v743, 4294901760
    %753 = vmatpush1.msra.mxu0 %v752
    %754 = vmatprep.subr.mxu0 0.0
    %755 = vmatpush1.msra.mxu0 0.0
    %756 = vmatprep.subr.mxu0 0.0
    %757 = vmatpush1.msra.mxu0 0.0
    %758 = vmatprep.subr.mxu0 0.0
    %759 = vmatpush1.msra.mxu0 0.0
    %760 = vmatprep.subr.mxu0 0.0
    %761 = vmatpush1.msra.mxu0 0.0
    %762 = vmatprep.subr.mxu0 0.0
    %763 = vmatpush1.msra.mxu0 0.0
    %764 = vmatprep.subr.mxu0 0.0
    %765 = vmatpush1.msra.mxu0 0.0
    %766 = vmatprep.subr.mxu0 0.0
    %767 = vmatpush1.msra.mxu0 0.0
    %768 = vmatprep.subr.mxu0 0.0
    %769 = vmatpush1.msra.mxu0 0.0
    %770 = vmatprep.subr.mxu0 0.0
    %771 = vmatpush1.msra.mxu0 0.0
    %772 = vmatprep.subr.mxu0 0.0
    %773 = vmatpush1.msra.mxu0 0.0
    %774 = vmatprep.subr.mxu0 0.0
    %775 = vmatpush1.msra.mxu0 0.0
    %776 = vmatprep.subr.mxu0 0.0
    %777 = vmatpush1.msra.mxu0 0.0
    %778 = vmatprep.subr.mxu0 0.0
    %779 = vmatpush1.msra.mxu0 0.0
    %780 = vmatprep.subr.mxu0 0.0
    %781 = vmatpush1.msra.mxu0 0.0
    %782 = vmatprep.subr.mxu0 0.0
    %783 = vmatpush1.msra.mxu0 0.0
    %784 = vmatprep.subr.mxu0 0.0
    %785 = vmatpush1.msra.mxu0 0.0
    %786 = vmatprep.subr.mxu0 0.0
    %787 = vmatpush1.msra.mxu0 0.0
    %788 = vmatprep.subr.mxu0 0.0
    %789 = vmatpush1.msra.mxu0 0.0
    %790 = vmatprep.subr.mxu0 0.0
    %791 = vmatpush1.msra.mxu0 0.0
    %792 = vmatprep.subr.mxu0 0.0
    %793 = vmatpush1.msra.mxu0 0.0
    %794 = vmatprep.subr.mxu0 0.0
    %795 = vmatpush1.msra.mxu0 0.0
    %796 = vmatprep.subr.mxu0 0.0
    %797 = vmatpush1.msra.mxu0 0.0
    %798 = vmatprep.subr.mxu0 0.0
    %799 = vmatpush1.msra.mxu0 0.0
    %800 = vmatprep.subr.mxu0 0.0
    %801 = vmatpush1.msra.mxu0 0.0
    %802 = vmatprep.subr.mxu0 0.0
    %803 = vmatpush1.msra.mxu0 0.0
    %804 = vmatprep.subr.mxu0 0.0
    %805 = vmatpush1.msra.mxu0 0.0
    %806 = vmatprep.subr.mxu0 0.0
    %807 = vmatpush1.msra.mxu0 0.0
    %808 = vmatprep.subr.mxu0 0.0
    %809 = vmatpush1.msra.mxu0 0.0
    %810 = vmatprep.subr.mxu0 0.0
    %811 = vmatpush1.msra.mxu0 0.0
    %812 = vmatprep.subr.mxu0 0.0
    %813 = vmatpush1.msra.mxu0 0.0
    %814 = vmatprep.subr.mxu0 0.0
    %815 = vmatpush1.msra.mxu0 0.0
    %816 = vmatprep.mubr.f32.mxu0 0.0
    %v817 = vand.u32 %v746, 4294901760
    %v818 = vsub.f32 %v746, %v817
    %v819 = vand.u32 %v818, 4294901760
    %v820 = vsub.f32 %v818, %v819
    %v821 = vand.u32 %v820, 4294901760
    %822 = vmatmul.mubr.f32.gmra.mrb[0].mxu0 %v821
    %v823 = vpop.f32.mrb[0].mxu0
    %v824 = vadd.f32 0.0, %v823
    %v825 = vpop.f32.mrb[0].mxu0
    %826 = vmatprep.mubr.f32.mxu0 0.0
    %v827 = vand.u32 %v749, 4294901760
    %v828 = vsub.f32 %v749, %v827
    %v829 = vand.u32 %v828, 4294901760
    %v830 = vsub.f32 %v828, %v829
    %v831 = vand.u32 %v830, 4294901760
    %832 = vmatmul.mubr.f32.gmra.mrb[0].mxu0 %v831
    %v833 = vpop.f32.mrb[0].mxu0
    %v834 = vadd.f32 0.0, %v833
    %v835 = vpop.f32.mrb[0].mxu0
    %836 = vdwg.mxu0
    %837 = vmatprep.subr.mxu0 0.0
    %v838 = vand.u32 %v743, 4294901760
    %v839 = vsub.f32 %v743, %v838
    %v840 = vand.u32 %v839, 4294901760
    %v841 = vsub.f32 %v839, %v840
    %v842 = vand.u32 %v841, 4294901760
    %843 = vmatpush1.msra.mxu0 %v842
    %844 = vmatprep.subr.mxu0 0.0
    %845 = vmatpush1.msra.mxu0 0.0
    %846 = vmatprep.subr.mxu0 0.0
    %847 = vmatpush1.msra.mxu0 0.0
    %848 = vmatprep.subr.mxu0 0.0
    %849 = vmatpush1.msra.mxu0 0.0
    %850 = vmatprep.subr.mxu0 0.0
    %851 = vmatpush1.msra.mxu0 0.0
    %852 = vmatprep.subr.mxu0 0.0
    %853 = vmatpush1.msra.mxu0 0.0
    %854 = vmatprep.subr.mxu0 0.0
    %855 = vmatpush1.msra.mxu0 0.0
    %856 = vmatprep.subr.mxu0 0.0
    %857 = vmatpush1.msra.mxu0 0.0
    %858 = vmatprep.subr.mxu0 0.0
    %859 = vmatpush1.msra.mxu0 0.0
    %860 = vmatprep.subr.mxu0 0.0
    %861 = vmatpush1.msra.mxu0 0.0
    %862 = vmatprep.subr.mxu0 0.0
    %863 = vmatpush1.msra.mxu0 0.0
    %864 = vmatprep.subr.mxu0 0.0
    %865 = vmatpush1.msra.mxu0 0.0
    %866 = vmatprep.subr.mxu0 0.0
    %867 = vmatpush1.msra.mxu0 0.0
    %868 = vmatprep.subr.mxu0 0.0
    %869 = vmatpush1.msra.mxu0 0.0
    %870 = vmatprep.subr.mxu0 0.0
    %871 = vmatpush1.msra.mxu0 0.0
    %872 = vmatprep.subr.mxu0 0.0
    %873 = vmatpush1.msra.mxu0 0.0
    %874 = vmatprep.subr.mxu0 0.0
    %875 = vmatpush1.msra.mxu0 0.0
    %876 = vmatprep.subr.mxu0 0.0
    %877 = vmatpush1.msra.mxu0 0.0
    %878 = vmatprep.subr.mxu0 0.0
    %879 = vmatpush1.msra.mxu0 0.0
    %880 = vmatprep.subr.mxu0 0.0
    %881 = vmatpush1.msra.mxu0 0.0
    %882 = vmatprep.subr.mxu0 0.0
    %883 = vmatpush1.msra.mxu0 0.0
    %884 = vmatprep.subr.mxu0 0.0
    %885 = vmatpush1.msra.mxu0 0.0
    %886 = vmatprep.subr.mxu0 0.0
    %887 = vmatpush1.msra.mxu0 0.0
    %888 = vmatprep.subr.mxu0 0.0
    %889 = vmatpush1.msra.mxu0 0.0
    %890 = vmatprep.subr.mxu0 0.0
    %891 = vmatpush1.msra.mxu0 0.0
    %892 = vmatprep.subr.mxu0 0.0
    %893 = vmatpush1.msra.mxu0 0.0
    %894 = vmatprep.subr.mxu0 0.0
    %895 = vmatpush1.msra.mxu0 0.0
    %896 = vmatprep.subr.mxu0 0.0
    %897 = vmatpush1.msra.mxu0 0.0
    %898 = vmatprep.subr.mxu0 0.0
    %899 = vmatpush1.msra.mxu0 0.0
    %900 = vmatprep.subr.mxu0 0.0
    %901 = vmatpush1.msra.mxu0 0.0
    %902 = vmatprep.subr.mxu0 0.0
    %903 = vmatpush1.msra.mxu0 0.0
    %904 = vmatprep.subr.mxu0 0.0
    %905 = vmatpush1.msra.mxu0 0.0
    %906 = vmatprep.mubr.f32.mxu0 0.0
    %v907 = vand.u32 %v746, 4294901760
    %908 = vmatmul.mubr.f32.gmra.mrb[0].mxu0 %v907
    %v909 = vpop.f32.mrb[0].mxu0
    %v910 = vadd.f32 %v824, %v909
    %v911 = vpop.f32.mrb[0].mxu0
    %912 = vmatprep.mubr.f32.mxu0 0.0
    %v913 = vand.u32 %v749, 4294901760
    %914 = vmatmul.mubr.f32.gmra.mrb[0].mxu0 %v913
    %v915 = vpop.f32.mrb[0].mxu0
    %v916 = vadd.f32 %v834, %v915
    %v917 = vpop.f32.mrb[0].mxu0
    %918 = vdwg.mxu0
    %919 = vmatprep.subr.mxu0 0.0
    %v920 = vand.u32 %v743, 4294901760
    %v921 = vsub.f32 %v743, %v920
    %922 = vmatpush1.msra.mxu0 %v921
    %923 = vmatprep.subr.mxu0 0.0
    %924 = vmatpush1.msra.mxu0 0.0
    %925 = vmatprep.subr.mxu0 0.0
    %926 = vmatpush1.msra.mxu0 0.0
    %927 = vmatprep.subr.mxu0 0.0
    %928 = vmatpush1.msra.mxu0 0.0
    %929 = vmatprep.subr.mxu0 0.0
    %930 = vmatpush1.msra.mxu0 0.0
    %931 = vmatprep.subr.mxu0 0.0
    %932 = vmatpush1.msra.mxu0 0.0
    %933 = vmatprep.subr.mxu0 0.0
    %934 = vmatpush1.msra.mxu0 0.0
    %935 = vmatprep.subr.mxu0 0.0
    %936 = vmatpush1.msra.mxu0 0.0
    %937 = vmatprep.subr.mxu0 0.0
    %938 = vmatpush1.msra.mxu0 0.0
    %939 = vmatprep.subr.mxu0 0.0
    %940 = vmatpush1.msra.mxu0 0.0
    %941 = vmatprep.subr.mxu0 0.0
    %942 = vmatpush1.msra.mxu0 0.0
    %943 = vmatprep.subr.mxu0 0.0
    %944 = vmatpush1.msra.mxu0 0.0
    %945 = vmatprep.subr.mxu0 0.0
    %946 = vmatpush1.msra.mxu0 0.0
    %947 = vmatprep.subr.mxu0 0.0
    %948 = vmatpush1.msra.mxu0 0.0
    %949 = vmatprep.subr.mxu0 0.0
    %950 = vmatpush1.msra.mxu0 0.0
    %951 = vmatprep.subr.mxu0 0.0
    %952 = vmatpush1.msra.mxu0 0.0
    %953 = vmatprep.subr.mxu0 0.0
    %954 = vmatpush1.msra.mxu0 0.0
    %955 = vmatprep.subr.mxu0 0.0
    %956 = vmatpush1.msra.mxu0 0.0
    %957 = vmatprep.subr.mxu0 0.0
    %958 = vmatpush1.msra.mxu0 0.0
    %959 = vmatprep.subr.mxu0 0.0
    %960 = vmatpush1.msra.mxu0 0.0
    %961 = vmatprep.subr.mxu0 0.0
    %962 = vmatpush1.msra.mxu0 0.0
    %963 = vmatprep.subr.mxu0 0.0
    %964 = vmatpush1.msra.mxu0 0.0
    %965 = vmatprep.subr.mxu0 0.0
    %966 = vmatpush1.msra.mxu0 0.0
    %967 = vmatprep.subr.mxu0 0.0
    %968 = vmatpush1.msra.mxu0 0.0
    %969 = vmatprep.subr.mxu0 0.0
    %970 = vmatpush1.msra.mxu0 0.0
    %971 = vmatprep.subr.mxu0 0.0
    %972 = vmatpush1.msra.mxu0 0.0
    %973 = vmatprep.subr.mxu0 0.0
    %974 = vmatpush1.msra.mxu0 0.0
    %975 = vmatprep.subr.mxu0 0.0
    %976 = vmatpush1.msra.mxu0 0.0
    %977 = vmatprep.subr.mxu0 0.0
    %978 = vmatpush1.msra.mxu0 0.0
    %979 = vmatprep.subr.mxu0 0.0
    %980 = vmatpush1.msra.mxu0 0.0
    %981 = vmatprep.subr.mxu0 0.0
    %982 = vmatpush1.msra.mxu0 0.0
    %983 = vmatprep.subr.mxu0 0.0
    %984 = vmatpush1.msra.mxu0 0.0
    %985 = vmatprep.mubr.f32.mxu0 0.0
    %v986 = vand.u32 %v746, 4294901760
    %v987 = vsub.f32 %v746, %v986
    %988 = vmatmul.mubr.f32.gmra.mrb[0].mxu0 %v987
    %v989 = vpop.f32.mrb[0].mxu0
    %v990 = vadd.f32 %v910, %v989
    %v991 = vpop.f32.mrb[0].mxu0
    %992 = vmatprep.mubr.f32.mxu0 0.0
    %v993 = vand.u32 %v749, 4294901760
    %v994 = vsub.f32 %v749, %v993
    %995 = vmatmul.mubr.f32.gmra.mrb[0].mxu0 %v994
    %v996 = vpop.f32.mrb[0].mxu0
    %v997 = vadd.f32 %v916, %v996
    %v998 = vpop.f32.mrb[0].mxu0
    %999 = vdwg.mxu0
    %1000 = vmatprep.subr.mxu0 0.0
    %v1001 = vand.u32 %v743, 4294901760
    %1002 = vmatpush1.msra.mxu0 %v1001
    %1003 = vmatprep.subr.mxu0 0.0
    %1004 = vmatpush1.msra.mxu0 0.0
    %1005 = vmatprep.subr.mxu0 0.0
    %1006 = vmatpush1.msra.mxu0 0.0
    %1007 = vmatprep.subr.mxu0 0.0
    %1008 = vmatpush1.msra.mxu0 0.0
    %1009 = vmatprep.subr.mxu0 0.0
    %1010 = vmatpush1.msra.mxu0 0.0
    %1011 = vmatprep.subr.mxu0 0.0
    %1012 = vmatpush1.msra.mxu0 0.0
    %1013 = vmatprep.subr.mxu0 0.0
    %1014 = vmatpush1.msra.mxu0 0.0
    %1015 = vmatprep.subr.mxu0 0.0
    %1016 = vmatpush1.msra.mxu0 0.0
    %1017 = vmatprep.subr.mxu0 0.0
    %1018 = vmatpush1.msra.mxu0 0.0
    %1019 = vmatprep.subr.mxu0 0.0
    %1020 = vmatpush1.msra.mxu0 0.0
    %1021 = vmatprep.subr.mxu0 0.0
    %1022 = vmatpush1.msra.mxu0 0.0
    %1023 = vmatprep.subr.mxu0 0.0
    %1024 = vmatpush1.msra.mxu0 0.0
    %1025 = vmatprep.subr.mxu0 0.0
    %1026 = vmatpush1.msra.mxu0 0.0
    %1027 = vmatprep.subr.mxu0 0.0
    %1028 = vmatpush1.msra.mxu0 0.0
    %1029 = vmatprep.subr.mxu0 0.0
    %1030 = vmatpush1.msra.mxu0 0.0
    %1031 = vmatprep.subr.mxu0 0.0
    %1032 = vmatpush1.msra.mxu0 0.0
    %1033 = vmatprep.subr.mxu0 0.0
    %1034 = vmatpush1.msra.mxu0 0.0
    %1035 = vmatprep.subr.mxu0 0.0
    %1036 = vmatpush1.msra.mxu0 0.0
    %1037 = vmatprep.subr.mxu0 0.0
    %1038 = vmatpush1.msra.mxu0 0.0
    %1039 = vmatprep.subr.mxu0 0.0
    %1040 = vmatpush1.msra.mxu0 0.0
    %1041 = vmatprep.subr.mxu0 0.0
    %1042 = vmatpush1.msra.mxu0 0.0
    %1043 = vmatprep.subr.mxu0 0.0
    %1044 = vmatpush1.msra.mxu0 0.0
    %1045 = vmatprep.subr.mxu0 0.0
    %1046 = vmatpush1.msra.mxu0 0.0
    %1047 = vmatprep.subr.mxu0 0.0
    %1048 = vmatpush1.msra.mxu0 0.0
    %1049 = vmatprep.subr.mxu0 0.0
    %1050 = vmatpush1.msra.mxu0 0.0
    %1051 = vmatprep.subr.mxu0 0.0
    %1052 = vmatpush1.msra.mxu0 0.0
    %1053 = vmatprep.subr.mxu0 0.0
    %1054 = vmatpush1.msra.mxu0 0.0
    %1055 = vmatprep.subr.mxu0 0.0
    %1056 = vmatpush1.msra.mxu0 0.0
    %1057 = vmatprep.subr.mxu0 0.0
    %1058 = vmatpush1.msra.mxu0 0.0
    %1059 = vmatprep.subr.mxu0 0.0
    %1060 = vmatpush1.msra.mxu0 0.0
    %1061 = vmatprep.subr.mxu0 0.0
    %1062 = vmatpush1.msra.mxu0 0.0
    %1063 = vmatprep.subr.mxu0 0.0
    %1064 = vmatpush1.msra.mxu0 0.0
    %1065 = vmatprep.mubr.f32.mxu0 0.0
    %v1066 = vand.u32 %v746, 4294901760
    %v1067 = vsub.f32 %v746, %v1066
    %v1068 = vand.u32 %v1067, 4294901760
    %1069 = vmatmul.mubr.f32.gmra.mrb[0].mxu0 %v1068
    %v1070 = vpop.f32.mrb[0].mxu0
    %v1071 = vadd.f32 %v990, %v1070
    %v1072 = vpop.f32.mrb[0].mxu0
    %1073 = vmatprep.mubr.f32.mxu0 0.0
    %v1074 = vand.u32 %v749, 4294901760
    %v1075 = vsub.f32 %v749, %v1074
    %v1076 = vand.u32 %v1075, 4294901760
    %1077 = vmatmul.mubr.f32.gmra.mrb[0].mxu0 %v1076
    %v1078 = vpop.f32.mrb[0].mxu0
    %v1079 = vadd.f32 %v997, %v1078
    %v1080 = vpop.f32.mrb[0].mxu0
    %1081 = vdwg.mxu0
    %1082 = vmatprep.subr.mxu0 0.0
    %v1083 = vand.u32 %v743, 4294901760
    %v1084 = vsub.f32 %v743, %v1083
    %v1085 = vand.u32 %v1084, 4294901760
    %1086 = vmatpush1.msra.mxu0 %v1085
    %1087 = vmatprep.subr.mxu0 0.0
    %1088 = vmatpush1.msra.mxu0 0.0
    %1089 = vmatprep.subr.mxu0 0.0
    %1090 = vmatpush1.msra.mxu0 0.0
    %1091 = vmatprep.subr.mxu0 0.0
    %1092 = vmatpush1.msra.mxu0 0.0
    %1093 = vmatprep.subr.mxu0 0.0
    %1094 = vmatpush1.msra.mxu0 0.0
    %1095 = vmatprep.subr.mxu0 0.0
    %1096 = vmatpush1.msra.mxu0 0.0
    %1097 = vmatprep.subr.mxu0 0.0
    %1098 = vmatpush1.msra.mxu0 0.0
    %1099 = vmatprep.subr.mxu0 0.0
    %1100 = vmatpush1.msra.mxu0 0.0
    %1101 = vmatprep.subr.mxu0 0.0
    %1102 = vmatpush1.msra.mxu0 0.0
    %1103 = vmatprep.subr.mxu0 0.0
    %1104 = vmatpush1.msra.mxu0 0.0
    %1105 = vmatprep.subr.mxu0 0.0
    %1106 = vmatpush1.msra.mxu0 0.0
    %1107 = vmatprep.subr.mxu0 0.0
    %1108 = vmatpush1.msra.mxu0 0.0
    %1109 = vmatprep.subr.mxu0 0.0
    %1110 = vmatpush1.msra.mxu0 0.0
    %1111 = vmatprep.subr.mxu0 0.0
    %1112 = vmatpush1.msra.mxu0 0.0
    %1113 = vmatprep.subr.mxu0 0.0
    %1114 = vmatpush1.msra.mxu0 0.0
    %1115 = vmatprep.subr.mxu0 0.0
    %1116 = vmatpush1.msra.mxu0 0.0
    %1117 = vmatprep.subr.mxu0 0.0
    %1118 = vmatpush1.msra.mxu0 0.0
    %1119 = vmatprep.subr.mxu0 0.0
    %1120 = vmatpush1.msra.mxu0 0.0
    %1121 = vmatprep.subr.mxu0 0.0
    %1122 = vmatpush1.msra.mxu0 0.0
    %1123 = vmatprep.subr.mxu0 0.0
    %1124 = vmatpush1.msra.mxu0 0.0
    %1125 = vmatprep.subr.mxu0 0.0
    %1126 = vmatpush1.msra.mxu0 0.0
    %1127 = vmatprep.subr.mxu0 0.0
    %1128 = vmatpush1.msra.mxu0 0.0
    %1129 = vmatprep.subr.mxu0 0.0
    %1130 = vmatpush1.msra.mxu0 0.0
    %1131 = vmatprep.subr.mxu0 0.0
    %1132 = vmatpush1.msra.mxu0 0.0
    %1133 = vmatprep.subr.mxu0 0.0
    %1134 = vmatpush1.msra.mxu0 0.0
    %1135 = vmatprep.subr.mxu0 0.0
    %1136 = vmatpush1.msra.mxu0 0.0
    %1137 = vmatprep.subr.mxu0 0.0
    %1138 = vmatpush1.msra.mxu0 0.0
    %1139 = vmatprep.subr.mxu0 0.0
    %1140 = vmatpush1.msra.mxu0 0.0
    %1141 = vmatprep.subr.mxu0 0.0
    %1142 = vmatpush1.msra.mxu0 0.0
    %1143 = vmatprep.subr.mxu0 0.0
    %1144 = vmatpush1.msra.mxu0 0.0
    %1145 = vmatprep.subr.mxu0 0.0
    %1146 = vmatpush1.msra.mxu0 0.0
    %1147 = vmatprep.subr.mxu0 0.0
    %1148 = vmatpush1.msra.mxu0 0.0
    %1149 = vmatprep.mubr.f32.mxu0 0.0
    %v1150 = vand.u32 %v746, 4294901760
    %1151 = vmatmul.mubr.f32.gmra.mrb[0].mxu0 %v1150
    %v1152 = vpop.f32.mrb[0].mxu0
    %v1153 = vadd.f32 %v1071, %v1152
    %v1154 = vpop.f32.mrb[0].mxu0
    %1155 = vmatprep.mubr.f32.mxu0 0.0
    %v1156 = vand.u32 %v749, 4294901760
    %1157 = vmatmul.mubr.f32.gmra.mrb[0].mxu0 %v1156
    %v1158 = vpop.f32.mrb[0].mxu0
    %v1159 = vadd.f32 %v1079, %v1158
    %v1160 = vpop.f32.mrb[0].mxu0
    %1161 = vdwg.mxu0
    %1162 = vmatprep.subr.mxu0 0.0
    %v1163 = vand.u32 %v743, 4294901760
    %1164 = vmatpush1.msra.mxu0 %v1163
    %1165 = vmatprep.subr.mxu0 0.0
    %1166 = vmatpush1.msra.mxu0 0.0
    %1167 = vmatprep.subr.mxu0 0.0
    %1168 = vmatpush1.msra.mxu0 0.0
    %1169 = vmatprep.subr.mxu0 0.0
    %1170 = vmatpush1.msra.mxu0 0.0
    %1171 = vmatprep.subr.mxu0 0.0
    %1172 = vmatpush1.msra.mxu0 0.0
    %1173 = vmatprep.subr.mxu0 0.0
    %1174 = vmatpush1.msra.mxu0 0.0
    %1175 = vmatprep.subr.mxu0 0.0
    %1176 = vmatpush1.msra.mxu0 0.0
    %1177 = vmatprep.subr.mxu0 0.0
    %1178 = vmatpush1.msra.mxu0 0.0
    %1179 = vmatprep.subr.mxu0 0.0
    %1180 = vmatpush1.msra.mxu0 0.0
    %1181 = vmatprep.subr.mxu0 0.0
    %1182 = vmatpush1.msra.mxu0 0.0
    %1183 = vmatprep.subr.mxu0 0.0
    %1184 = vmatpush1.msra.mxu0 0.0
    %1185 = vmatprep.subr.mxu0 0.0
    %1186 = vmatpush1.msra.mxu0 0.0
    %1187 = vmatprep.subr.mxu0 0.0
    %1188 = vmatpush1.msra.mxu0 0.0
    %1189 = vmatprep.subr.mxu0 0.0
    %1190 = vmatpush1.msra.mxu0 0.0
    %1191 = vmatprep.subr.mxu0 0.0
    %1192 = vmatpush1.msra.mxu0 0.0
    %1193 = vmatprep.subr.mxu0 0.0
    %1194 = vmatpush1.msra.mxu0 0.0
    %1195 = vmatprep.subr.mxu0 0.0
    %1196 = vmatpush1.msra.mxu0 0.0
    %1197 = vmatprep.subr.mxu0 0.0
    %1198 = vmatpush1.msra.mxu0 0.0
    %1199 = vmatprep.subr.mxu0 0.0
    %1200 = vmatpush1.msra.mxu0 0.0
    %1201 = vmatprep.subr.mxu0 0.0
    %1202 = vmatpush1.msra.mxu0 0.0
    %1203 = vmatprep.subr.mxu0 0.0
    %1204 = vmatpush1.msra.mxu0 0.0
    %1205 = vmatprep.subr.mxu0 0.0
    %1206 = vmatpush1.msra.mxu0 0.0
    %1207 = vmatprep.subr.mxu0 0.0
    %1208 = vmatpush1.msra.mxu0 0.0
    %1209 = vmatprep.subr.mxu0 0.0
    %1210 = vmatpush1.msra.mxu0 0.0
    %1211 = vmatprep.subr.mxu0 0.0
    %1212 = vmatpush1.msra.mxu0 0.0
    %1213 = vmatprep.subr.mxu0 0.0
    %1214 = vmatpush1.msra.mxu0 0.0
    %1215 = vmatprep.subr.mxu0 0.0
    %1216 = vmatpush1.msra.mxu0 0.0
    %1217 = vmatprep.subr.mxu0 0.0
    %1218 = vmatpush1.msra.mxu0 0.0
    %1219 = vmatprep.subr.mxu0 0.0
    %1220 = vmatpush1.msra.mxu0 0.0
    %1221 = vmatprep.subr.mxu0 0.0
    %1222 = vmatpush1.msra.mxu0 0.0
    %1223 = vmatprep.subr.mxu0 0.0
    %1224 = vmatpush1.msra.mxu0 0.0
    %1225 = vmatprep.subr.mxu0 0.0
    %1226 = vmatpush1.msra.mxu0 0.0
    %1227 = vmatprep.mubr.f32.mxu0 0.0
    %v1228 = vand.u32 %v746, 4294901760
    %1229 = vmatmul.mubr.f32.gmra.mrb[0].mxu0 %v1228
    %v1230 = vpop.f32.mrb[0].mxu0
    %v1231 = vadd.f32 %v1153, %v1230
    %v1232 = vpop.f32.mrb[0].mxu0
    %1233 = vmatprep.mubr.f32.mxu0 0.0
    %v1234 = vand.u32 %v749, 4294901760
    %1235 = vmatmul.mubr.f32.gmra.mrb[0].mxu0 %v1234
    %v1236 = vpop.f32.mrb[0].mxu0
    %v1237 = vadd.f32 %v1159, %v1236
    %v1238 = vpop.f32.mrb[0].mxu0
    %1239 = vdwg.mxu0
    %v1240 = vmul.f32 %v739, %v1231
    %v1241 = vmul.f32 %v740, %v1237
    %v1242 = vld [vmem:[%s5] sm:$0xff]
    %v1243 = vld [vmem:[%s5 + $0x8] sm:$0xff]
    %v1244 = vld [vmem:[%s5 + $0x10] sm:$0xff]
    %v1245 = vld [vmem:[%s5 + $0x18] sm:$0xff]
    %v1246 = vld [vmem:[%s5 + $0x20] sm:$0xff]
    %v1247 = vld [vmem:[%s5 + $0x28] sm:$0xff]
    %v1248 = vld [vmem:[%s5 + $0x30] sm:$0xff]
    %v1249 = vld [vmem:[%s5 + $0x38] sm:$0xff]
    %v1250 = vld [vmem:[%s5 + $0x40] sm:$0xff]
    %v1251 = vld [vmem:[%s5 + $0x48] sm:$0xff]
    %v1252 = vld [vmem:[%s5 + $0x50] sm:$0xff]
    %v1253 = vld [vmem:[%s5 + $0x58] sm:$0xff]
    %v1254 = vld [vmem:[%s5 + $0x60] sm:$0xff]
    %v1255 = vld [vmem:[%s5 + $0x68] sm:$0xff]
    %v1256 = vld [vmem:[%s5 + $0x70] sm:$0xff]
    %v1257 = vld [vmem:[%s5 + $0x78] sm:$0xff]
    %1258 = vmatprep.subr.mxu0 0.0
    %v1259 = vand.u32 %v1242, 4294901760
    %1260 = vmatpush1.msra.mxu0 %v1259
    %1261 = vmatprep.subr.mxu0 0.0
    %v1262 = vand.u32 %v1243, 4294901760
    %1263 = vmatpush1.msra.mxu0 %v1262
    %1264 = vmatprep.subr.mxu0 0.0
    %v1265 = vand.u32 %v1244, 4294901760
    %1266 = vmatpush1.msra.mxu0 %v1265
    %1267 = vmatprep.subr.mxu0 0.0
    %v1268 = vand.u32 %v1245, 4294901760
    %1269 = vmatpush1.msra.mxu0 %v1268
    %1270 = vmatprep.subr.mxu0 0.0
    %v1271 = vand.u32 %v1246, 4294901760
    %1272 = vmatpush1.msra.mxu0 %v1271
    %1273 = vmatprep.subr.mxu0 0.0
    %v1274 = vand.u32 %v1247, 4294901760
    %1275 = vmatpush1.msra.mxu0 %v1274
    %1276 = vmatprep.subr.mxu0 0.0
    %v1277 = vand.u32 %v1248, 4294901760
    %1278 = vmatpush1.msra.mxu0 %v1277
    %1279 = vmatprep.subr.mxu0 0.0
    %v1280 = vand.u32 %v1249, 4294901760
    %1281 = vmatpush1.msra.mxu0 %v1280
    %1282 = vmatprep.subr.mxu0 0.0
    %v1283 = vand.u32 %v1250, 4294901760
    %1284 = vmatpush1.msra.mxu0 %v1283
    %1285 = vmatprep.subr.mxu0 0.0
    %v1286 = vand.u32 %v1251, 4294901760
    %1287 = vmatpush1.msra.mxu0 %v1286
    %1288 = vmatprep.subr.mxu0 0.0
    %v1289 = vand.u32 %v1252, 4294901760
    %1290 = vmatpush1.msra.mxu0 %v1289
    %1291 = vmatprep.subr.mxu0 0.0
    %v1292 = vand.u32 %v1253, 4294901760
    %1293 = vmatpush1.msra.mxu0 %v1292
    %1294 = vmatprep.subr.mxu0 0.0
    %v1295 = vand.u32 %v1254, 4294901760
    %1296 = vmatpush1.msra.mxu0 %v1295
    %1297 = vmatprep.subr.mxu0 0.0
    %v1298 = vand.u32 %v1255, 4294901760
    %1299 = vmatpush1.msra.mxu0 %v1298
    %1300 = vmatprep.subr.mxu0 0.0
    %v1301 = vand.u32 %v1256, 4294901760
    %1302 = vmatpush1.msra.mxu0 %v1301
    %1303 = vmatprep.subr.mxu0 0.0
    %v1304 = vand.u32 %v1257, 4294901760
    %1305 = vmatpush1.msra.mxu0 %v1304
    %1306 = vmatprep.subr.mxu0 0.0
    %1307 = vmatpush1.msra.mxu0 0.0
    %1308 = vmatprep.subr.mxu0 0.0
    %1309 = vmatpush1.msra.mxu0 0.0
    %1310 = vmatprep.subr.mxu0 0.0
    %1311 = vmatpush1.msra.mxu0 0.0
    %1312 = vmatprep.subr.mxu0 0.0
    %1313 = vmatpush1.msra.mxu0 0.0
    %1314 = vmatprep.subr.mxu0 0.0
    %1315 = vmatpush1.msra.mxu0 0.0
    %1316 = vmatprep.subr.mxu0 0.0
    %1317 = vmatpush1.msra.mxu0 0.0
    %1318 = vmatprep.subr.mxu0 0.0
    %1319 = vmatpush1.msra.mxu0 0.0
    %1320 = vmatprep.subr.mxu0 0.0
    %1321 = vmatpush1.msra.mxu0 0.0
    %1322 = vmatprep.subr.mxu0 0.0
    %1323 = vmatpush1.msra.mxu0 0.0
    %1324 = vmatprep.subr.mxu0 0.0
    %1325 = vmatpush1.msra.mxu0 0.0
    %1326 = vmatprep.subr.mxu0 0.0
    %1327 = vmatpush1.msra.mxu0 0.0
    %1328 = vmatprep.subr.mxu0 0.0
    %1329 = vmatpush1.msra.mxu0 0.0
    %1330 = vmatprep.subr.mxu0 0.0
    %1331 = vmatpush1.msra.mxu0 0.0
    %1332 = vmatprep.subr.mxu0 0.0
    %1333 = vmatpush1.msra.mxu0 0.0
    %1334 = vmatprep.subr.mxu0 0.0
    %1335 = vmatpush1.msra.mxu0 0.0
    %1336 = vmatprep.subr.mxu0 0.0
    %1337 = vmatpush1.msra.mxu0 0.0
    %1338 = vmatprep.mubr.f32.mxu0 0.0
    %v1339 = vand.u32 %v1240, 4294901760
    %v1340 = vsub.f32 %v1240, %v1339
    %v1341 = vand.u32 %v1340, 4294901760
    %v1342 = vsub.f32 %v1340, %v1341
    %v1343 = vand.u32 %v1342, 4294901760
    %1344 = vmatmul.mubr.f32.gmra.mrb[0].mxu0 %v1343
    %v1345 = vpop.f32.mrb[0].mxu0
    %v1346 = vadd.f32 0.0, %v1345
    %v1347 = vpop.f32.mrb[0].mxu0
    %1348 = vmatprep.mubr.f32.mxu0 0.0
    %v1349 = vand.u32 %v1241, 4294901760
    %v1350 = vsub.f32 %v1241, %v1349
    %v1351 = vand.u32 %v1350, 4294901760
    %v1352 = vsub.f32 %v1350, %v1351
    %v1353 = vand.u32 %v1352, 4294901760
    %1354 = vmatmul.mubr.f32.gmra.mrb[0].mxu0 %v1353
    %v1355 = vpop.f32.mrb[0].mxu0
    %v1356 = vadd.f32 0.0, %v1355
    %v1357 = vpop.f32.mrb[0].mxu0
    %1358 = vdwg.mxu0
    %1359 = vmatprep.subr.mxu0 0.0
    %v1360 = vand.u32 %v1242, 4294901760
    %v1361 = vsub.f32 %v1242, %v1360
    %v1362 = vand.u32 %v1361, 4294901760
    %v1363 = vsub.f32 %v1361, %v1362
    %v1364 = vand.u32 %v1363, 4294901760
    %1365 = vmatpush1.msra.mxu0 %v1364
    %1366 = vmatprep.subr.mxu0 0.0
    %v1367 = vand.u32 %v1243, 4294901760
    %v1368 = vsub.f32 %v1243, %v1367
    %v1369 = vand.u32 %v1368, 4294901760
    %v1370 = vsub.f32 %v1368, %v1369
    %v1371 = vand.u32 %v1370, 4294901760
    %1372 = vmatpush1.msra.mxu0 %v1371
    %1373 = vmatprep.subr.mxu0 0.0
    %v1374 = vand.u32 %v1244, 4294901760
    %v1375 = vsub.f32 %v1244, %v1374
    %v1376 = vand.u32 %v1375, 4294901760
    %v1377 = vsub.f32 %v1375, %v1376
    %v1378 = vand.u32 %v1377, 4294901760
    %1379 = vmatpush1.msra.mxu0 %v1378
    %1380 = vmatprep.subr.mxu0 0.0
    %v1381 = vand.u32 %v1245, 4294901760
    %v1382 = vsub.f32 %v1245, %v1381
    %v1383 = vand.u32 %v1382, 4294901760
    %v1384 = vsub.f32 %v1382, %v1383
    %v1385 = vand.u32 %v1384, 4294901760
    %1386 = vmatpush1.msra.mxu0 %v1385
    %1387 = vmatprep.subr.mxu0 0.0
    %v1388 = vand.u32 %v1246, 4294901760
    %v1389 = vsub.f32 %v1246, %v1388
    %v1390 = vand.u32 %v1389, 4294901760
    %v1391 = vsub.f32 %v1389, %v1390
    %v1392 = vand.u32 %v1391, 4294901760
    %1393 = vmatpush1.msra.mxu0 %v1392
    %1394 = vmatprep.subr.mxu0 0.0
    %v1395 = vand.u32 %v1247, 4294901760
    %v1396 = vsub.f32 %v1247, %v1395
    %v1397 = vand.u32 %v1396, 4294901760
    %v1398 = vsub.f32 %v1396, %v1397
    %v1399 = vand.u32 %v1398, 4294901760
    %1400 = vmatpush1.msra.mxu0 %v1399
    %1401 = vmatprep.subr.mxu0 0.0
    %v1402 = vand.u32 %v1248, 4294901760
    %v1403 = vsub.f32 %v1248, %v1402
    %v1404 = vand.u32 %v1403, 4294901760
    %v1405 = vsub.f32 %v1403, %v1404
    %v1406 = vand.u32 %v1405, 4294901760
    %1407 = vmatpush1.msra.mxu0 %v1406
    %1408 = vmatprep.subr.mxu0 0.0
    %v1409 = vand.u32 %v1249, 4294901760
    %v1410 = vsub.f32 %v1249, %v1409
    %v1411 = vand.u32 %v1410, 4294901760
    %v1412 = vsub.f32 %v1410, %v1411
    %v1413 = vand.u32 %v1412, 4294901760
    %1414 = vmatpush1.msra.mxu0 %v1413
    %1415 = vmatprep.subr.mxu0 0.0
    %v1416 = vand.u32 %v1250, 4294901760
    %v1417 = vsub.f32 %v1250, %v1416
    %v1418 = vand.u32 %v1417, 4294901760
    %v1419 = vsub.f32 %v1417, %v1418
    %v1420 = vand.u32 %v1419, 4294901760
    %1421 = vmatpush1.msra.mxu0 %v1420
    %1422 = vmatprep.subr.mxu0 0.0
    %v1423 = vand.u32 %v1251, 4294901760
    %v1424 = vsub.f32 %v1251, %v1423
    %v1425 = vand.u32 %v1424, 4294901760
    %v1426 = vsub.f32 %v1424, %v1425
    %v1427 = vand.u32 %v1426, 4294901760
    %1428 = vmatpush1.msra.mxu0 %v1427
    %1429 = vmatprep.subr.mxu0 0.0
    %v1430 = vand.u32 %v1252, 4294901760
    %v1431 = vsub.f32 %v1252, %v1430
    %v1432 = vand.u32 %v1431, 4294901760
    %v1433 = vsub.f32 %v1431, %v1432
    %v1434 = vand.u32 %v1433, 4294901760
    %1435 = vmatpush1.msra.mxu0 %v1434
    %1436 = vmatprep.subr.mxu0 0.0
    %v1437 = vand.u32 %v1253, 4294901760
    %v1438 = vsub.f32 %v1253, %v1437
    %v1439 = vand.u32 %v1438, 4294901760
    %v1440 = vsub.f32 %v1438, %v1439
    %v1441 = vand.u32 %v1440, 4294901760
    %1442 = vmatpush1.msra.mxu0 %v1441
    %1443 = vmatprep.subr.mxu0 0.0
    %v1444 = vand.u32 %v1254, 4294901760
    %v1445 = vsub.f32 %v1254, %v1444
    %v1446 = vand.u32 %v1445, 4294901760
    %v1447 = vsub.f32 %v1445, %v1446
    %v1448 = vand.u32 %v1447, 4294901760
    %1449 = vmatpush1.msra.mxu0 %v1448
    %1450 = vmatprep.subr.mxu0 0.0
    %v1451 = vand.u32 %v1255, 4294901760
    %v1452 = vsub.f32 %v1255, %v1451
    %v1453 = vand.u32 %v1452, 4294901760
    %v1454 = vsub.f32 %v1452, %v1453
    %v1455 = vand.u32 %v1454, 4294901760
    %1456 = vmatpush1.msra.mxu0 %v1455
    %1457 = vmatprep.subr.mxu0 0.0
    %v1458 = vand.u32 %v1256, 4294901760
    %v1459 = vsub.f32 %v1256, %v1458
    %v1460 = vand.u32 %v1459, 4294901760
    %v1461 = vsub.f32 %v1459, %v1460
    %v1462 = vand.u32 %v1461, 4294901760
    %1463 = vmatpush1.msra.mxu0 %v1462
    %1464 = vmatprep.subr.mxu0 0.0
    %v1465 = vand.u32 %v1257, 4294901760
    %v1466 = vsub.f32 %v1257, %v1465
    %v1467 = vand.u32 %v1466, 4294901760
    %v1468 = vsub.f32 %v1466, %v1467
    %v1469 = vand.u32 %v1468, 4294901760
    %1470 = vmatpush1.msra.mxu0 %v1469
    %1471 = vmatprep.subr.mxu0 0.0
    %1472 = vmatpush1.msra.mxu0 0.0
    %1473 = vmatprep.subr.mxu0 0.0
    %1474 = vmatpush1.msra.mxu0 0.0
    %1475 = vmatprep.subr.mxu0 0.0
    %1476 = vmatpush1.msra.mxu0 0.0
    %1477 = vmatprep.subr.mxu0 0.0
    %1478 = vmatpush1.msra.mxu0 0.0
    %1479 = vmatprep.subr.mxu0 0.0
    %1480 = vmatpush1.msra.mxu0 0.0
    %1481 = vmatprep.subr.mxu0 0.0
    %1482 = vmatpush1.msra.mxu0 0.0
    %1483 = vmatprep.subr.mxu0 0.0
    %1484 = vmatpush1.msra.mxu0 0.0
    %1485 = vmatprep.subr.mxu0 0.0
    %1486 = vmatpush1.msra.mxu0 0.0
    %1487 = vmatprep.subr.mxu0 0.0
    %1488 = vmatpush1.msra.mxu0 0.0
    %1489 = vmatprep.subr.mxu0 0.0
    %1490 = vmatpush1.msra.mxu0 0.0
    %1491 = vmatprep.subr.mxu0 0.0
    %1492 = vmatpush1.msra.mxu0 0.0
    %1493 = vmatprep.subr.mxu0 0.0
    %1494 = vmatpush1.msra.mxu0 0.0
    %1495 = vmatprep.subr.mxu0 0.0
    %1496 = vmatpush1.msra.mxu0 0.0
    %1497 = vmatprep.subr.mxu0 0.0
    %1498 = vmatpush1.msra.mxu0 0.0
    %1499 = vmatprep.subr.mxu0 0.0
    %1500 = vmatpush1.msra.mxu0 0.0
    %1501 = vmatprep.subr.mxu0 0.0
    %1502 = vmatpush1.msra.mxu0 0.0
    %1503 = vmatprep.mubr.f32.mxu0 0.0
    %v1504 = vand.u32 %v1240, 4294901760
    %1505 = vmatmul.mubr.f32.gmra.mrb[0].mxu0 %v1504
    %v1506 = vpop.f32.mrb[0].mxu0
    %v1507 = vadd.f32 %v1346, %v1506
    %v1508 = vpop.f32.mrb[0].mxu0
    %1509 = vmatprep.mubr.f32.mxu0 0.0
    %v1510 = vand.u32 %v1241, 4294901760
    %1511 = vmatmul.mubr.f32.gmra.mrb[0].mxu0 %v1510
    %v1512 = vpop.f32.mrb[0].mxu0
    %v1513 = vadd.f32 %v1356, %v1512
    %v1514 = vpop.f32.mrb[0].mxu0
    %1515 = vdwg.mxu0
    %1516 = vmatprep.subr.mxu0 0.0
    %v1517 = vand.u32 %v1242, 4294901760
    %v1518 = vsub.f32 %v1242, %v1517
    %1519 = vmatpush1.msra.mxu0 %v1518
    %1520 = vmatprep.subr.mxu0 0.0
    %v1521 = vand.u32 %v1243, 4294901760
    %v1522 = vsub.f32 %v1243, %v1521
    %1523 = vmatpush1.msra.mxu0 %v1522
    %1524 = vmatprep.subr.mxu0 0.0
    %v1525 = vand.u32 %v1244, 4294901760
    %v1526 = vsub.f32 %v1244, %v1525
    %1527 = vmatpush1.msra.mxu0 %v1526
    %1528 = vmatprep.subr.mxu0 0.0
    %v1529 = vand.u32 %v1245, 4294901760
    %v1530 = vsub.f32 %v1245, %v1529
    %1531 = vmatpush1.msra.mxu0 %v1530
    %1532 = vmatprep.subr.mxu0 0.0
    %v1533 = vand.u32 %v1246, 4294901760
    %v1534 = vsub.f32 %v1246, %v1533
    %1535 = vmatpush1.msra.mxu0 %v1534
    %1536 = vmatprep.subr.mxu0 0.0
    %v1537 = vand.u32 %v1247, 4294901760
    %v1538 = vsub.f32 %v1247, %v1537
    %1539 = vmatpush1.msra.mxu0 %v1538
    %1540 = vmatprep.subr.mxu0 0.0
    %v1541 = vand.u32 %v1248, 4294901760
    %v1542 = vsub.f32 %v1248, %v1541
    %1543 = vmatpush1.msra.mxu0 %v1542
    %1544 = vmatprep.subr.mxu0 0.0
    %v1545 = vand.u32 %v1249, 4294901760
    %v1546 = vsub.f32 %v1249, %v1545
    %1547 = vmatpush1.msra.mxu0 %v1546
    %1548 = vmatprep.subr.mxu0 0.0
    %v1549 = vand.u32 %v1250, 4294901760
    %v1550 = vsub.f32 %v1250, %v1549
    %1551 = vmatpush1.msra.mxu0 %v1550
    %1552 = vmatprep.subr.mxu0 0.0
    %v1553 = vand.u32 %v1251, 4294901760
    %v1554 = vsub.f32 %v1251, %v1553
    %1555 = vmatpush1.msra.mxu0 %v1554
    %1556 = vmatprep.subr.mxu0 0.0
    %v1557 = vand.u32 %v1252, 4294901760
    %v1558 = vsub.f32 %v1252, %v1557
    %1559 = vmatpush1.msra.mxu0 %v1558
    %1560 = vmatprep.subr.mxu0 0.0
    %v1561 = vand.u32 %v1253, 4294901760
    %v1562 = vsub.f32 %v1253, %v1561
    %1563 = vmatpush1.msra.mxu0 %v1562
    %1564 = vmatprep.subr.mxu0 0.0
    %v1565 = vand.u32 %v1254, 4294901760
    %v1566 = vsub.f32 %v1254, %v1565
    %1567 = vmatpush1.msra.mxu0 %v1566
    %1568 = vmatprep.subr.mxu0 0.0
    %v1569 = vand.u32 %v1255, 4294901760
    %v1570 = vsub.f32 %v1255, %v1569
    %1571 = vmatpush1.msra.mxu0 %v1570
    %1572 = vmatprep.subr.mxu0 0.0
    %v1573 = vand.u32 %v1256, 4294901760
    %v1574 = vsub.f32 %v1256, %v1573
    %1575 = vmatpush1.msra.mxu0 %v1574
    %1576 = vmatprep.subr.mxu0 0.0
    %v1577 = vand.u32 %v1257, 4294901760
    %v1578 = vsub.f32 %v1257, %v1577
    %1579 = vmatpush1.msra.mxu0 %v1578
    %1580 = vmatprep.subr.mxu0 0.0
    %1581 = vmatpush1.msra.mxu0 0.0
    %1582 = vmatprep.subr.mxu0 0.0
    %1583 = vmatpush1.msra.mxu0 0.0
    %1584 = vmatprep.subr.mxu0 0.0
    %1585 = vmatpush1.msra.mxu0 0.0
    %1586 = vmatprep.subr.mxu0 0.0
    %1587 = vmatpush1.msra.mxu0 0.0
    %1588 = vmatprep.subr.mxu0 0.0
    %1589 = vmatpush1.msra.mxu0 0.0
    %1590 = vmatprep.subr.mxu0 0.0
    %1591 = vmatpush1.msra.mxu0 0.0
    %1592 = vmatprep.subr.mxu0 0.0
    %1593 = vmatpush1.msra.mxu0 0.0
    %1594 = vmatprep.subr.mxu0 0.0
    %1595 = vmatpush1.msra.mxu0 0.0
    %1596 = vmatprep.subr.mxu0 0.0
    %1597 = vmatpush1.msra.mxu0 0.0
    %1598 = vmatprep.subr.mxu0 0.0
    %1599 = vmatpush1.msra.mxu0 0.0
    %1600 = vmatprep.subr.mxu0 0.0
    %1601 = vmatpush1.msra.mxu0 0.0
    %1602 = vmatprep.subr.mxu0 0.0
    %1603 = vmatpush1.msra.mxu0 0.0
    %1604 = vmatprep.subr.mxu0 0.0
    %1605 = vmatpush1.msra.mxu0 0.0
    %1606 = vmatprep.subr.mxu0 0.0
    %1607 = vmatpush1.msra.mxu0 0.0
    %1608 = vmatprep.subr.mxu0 0.0
    %1609 = vmatpush1.msra.mxu0 0.0
    %1610 = vmatprep.subr.mxu0 0.0
    %1611 = vmatpush1.msra.mxu0 0.0
    %1612 = vmatprep.mubr.f32.mxu0 0.0
    %v1613 = vand.u32 %v1240, 4294901760
    %v1614 = vsub.f32 %v1240, %v1613
    %1615 = vmatmul.mubr.f32.gmra.mrb[0].mxu0 %v1614
    %v1616 = vpop.f32.mrb[0].mxu0
    %v1617 = vadd.f32 %v1507, %v1616
    %v1618 = vpop.f32.mrb[0].mxu0
    %1619 = vmatprep.mubr.f32.mxu0 0.0
    %v1620 = vand.u32 %v1241, 4294901760
    %v1621 = vsub.f32 %v1241, %v1620
    %1622 = vmatmul.mubr.f32.gmra.mrb[0].mxu0 %v1621
    %v1623 = vpop.f32.mrb[0].mxu0
    %v1624 = vadd.f32 %v1513, %v1623
    %v1625 = vpop.f32.mrb[0].mxu0
    %1626 = vdwg.mxu0
    %1627 = vmatprep.subr.mxu0 0.0
    %v1628 = vand.u32 %v1242, 4294901760
    %1629 = vmatpush1.msra.mxu0 %v1628
    %1630 = vmatprep.subr.mxu0 0.0
    %v1631 = vand.u32 %v1243, 4294901760
    %1632 = vmatpush1.msra.mxu0 %v1631
    %1633 = vmatprep.subr.mxu0 0.0
    %v1634 = vand.u32 %v1244, 4294901760
    %1635 = vmatpush1.msra.mxu0 %v1634
    %1636 = vmatprep.subr.mxu0 0.0
    %v1637 = vand.u32 %v1245, 4294901760
    %1638 = vmatpush1.msra.mxu0 %v1637
    %1639 = vmatprep.subr.mxu0 0.0
    %v1640 = vand.u32 %v1246, 4294901760
    %1641 = vmatpush1.msra.mxu0 %v1640
    %1642 = vmatprep.subr.mxu0 0.0
    %v1643 = vand.u32 %v1247, 4294901760
    %1644 = vmatpush1.msra.mxu0 %v1643
    %1645 = vmatprep.subr.mxu0 0.0
    %v1646 = vand.u32 %v1248, 4294901760
    %1647 = vmatpush1.msra.mxu0 %v1646
    %1648 = vmatprep.subr.mxu0 0.0
    %v1649 = vand.u32 %v1249, 4294901760
    %1650 = vmatpush1.msra.mxu0 %v1649
    %1651 = vmatprep.subr.mxu0 0.0
    %v1652 = vand.u32 %v1250, 4294901760
    %1653 = vmatpush1.msra.mxu0 %v1652
    %1654 = vmatprep.subr.mxu0 0.0
    %v1655 = vand.u32 %v1251, 4294901760
    %1656 = vmatpush1.msra.mxu0 %v1655
    %1657 = vmatprep.subr.mxu0 0.0
    %v1658 = vand.u32 %v1252, 4294901760
    %1659 = vmatpush1.msra.mxu0 %v1658
    %1660 = vmatprep.subr.mxu0 0.0
    %v1661 = vand.u32 %v1253, 4294901760
    %1662 = vmatpush1.msra.mxu0 %v1661
    %1663 = vmatprep.subr.mxu0 0.0
    %v1664 = vand.u32 %v1254, 4294901760
    %1665 = vmatpush1.msra.mxu0 %v1664
    %1666 = vmatprep.subr.mxu0 0.0
    %v1667 = vand.u32 %v1255, 4294901760
    %1668 = vmatpush1.msra.mxu0 %v1667
    %1669 = vmatprep.subr.mxu0 0.0
    %v1670 = vand.u32 %v1256, 4294901760
    %1671 = vmatpush1.msra.mxu0 %v1670
    %1672 = vmatprep.subr.mxu0 0.0
    %v1673 = vand.u32 %v1257, 4294901760
    %1674 = vmatpush1.msra.mxu0 %v1673
    %1675 = vmatprep.subr.mxu0 0.0
    %1676 = vmatpush1.msra.mxu0 0.0
    %1677 = vmatprep.subr.mxu0 0.0
    %1678 = vmatpush1.msra.mxu0 0.0
    %1679 = vmatprep.subr.mxu0 0.0
    %1680 = vmatpush1.msra.mxu0 0.0
    %1681 = vmatprep.subr.mxu0 0.0
    %1682 = vmatpush1.msra.mxu0 0.0
    %1683 = vmatprep.subr.mxu0 0.0
    %1684 = vmatpush1.msra.mxu0 0.0
    %1685 = vmatprep.subr.mxu0 0.0
    %1686 = vmatpush1.msra.mxu0 0.0
    %1687 = vmatprep.subr.mxu0 0.0
    %1688 = vmatpush1.msra.mxu0 0.0
    %1689 = vmatprep.subr.mxu0 0.0
    %1690 = vmatpush1.msra.mxu0 0.0
    %1691 = vmatprep.subr.mxu0 0.0
    %1692 = vmatpush1.msra.mxu0 0.0
    %1693 = vmatprep.subr.mxu0 0.0
    %1694 = vmatpush1.msra.mxu0 0.0
    %1695 = vmatprep.subr.mxu0 0.0
    %1696 = vmatpush1.msra.mxu0 0.0
    %1697 = vmatprep.subr.mxu0 0.0
    %1698 = vmatpush1.msra.mxu0 0.0
    %1699 = vmatprep.subr.mxu0 0.0
    %1700 = vmatpush1.msra.mxu0 0.0
    %1701 = vmatprep.subr.mxu0 0.0
    %1702 = vmatpush1.msra.mxu0 0.0
    %1703 = vmatprep.subr.mxu0 0.0
    %1704 = vmatpush1.msra.mxu0 0.0
    %1705 = vmatprep.subr.mxu0 0.0
    %1706 = vmatpush1.msra.mxu0 0.0
    %1707 = vmatprep.mubr.f32.mxu0 0.0
    %v1708 = vand.u32 %v1240, 4294901760
    %v1709 = vsub.f32 %v1240, %v1708
    %v1710 = vand.u32 %v1709, 4294901760
    %1711 = vmatmul.mubr.f32.gmra.mrb[0].mxu0 %v1710
    %v1712 = vpop.f32.mrb[0].mxu0
    %v1713 = vadd.f32 %v1617, %v1712
    %v1714 = vpop.f32.mrb[0].mxu0
    %1715 = vmatprep.mubr.f32.mxu0 0.0
    %v1716 = vand.u32 %v1241, 4294901760
    %v1717 = vsub.f32 %v1241, %v1716
    %v1718 = vand.u32 %v1717, 4294901760
    %1719 = vmatmul.mubr.f32.gmra.mrb[0].mxu0 %v1718
    %v1720 = vpop.f32.mrb[0].mxu0
    %v1721 = vadd.f32 %v1624, %v1720
    %v1722 = vpop.f32.mrb[0].mxu0
    %1723 = vdwg.mxu0
    %1724 = vmatprep.subr.mxu0 0.0
    %v1725 = vand.u32 %v1242, 4294901760
    %v1726 = vsub.f32 %v1242, %v1725
    %v1727 = vand.u32 %v1726, 4294901760
    %1728 = vmatpush1.msra.mxu0 %v1727
    %1729 = vmatprep.subr.mxu0 0.0
    %v1730 = vand.u32 %v1243, 4294901760
    %v1731 = vsub.f32 %v1243, %v1730
    %v1732 = vand.u32 %v1731, 4294901760
    %1733 = vmatpush1.msra.mxu0 %v1732
    %1734 = vmatprep.subr.mxu0 0.0
    %v1735 = vand.u32 %v1244, 4294901760
    %v1736 = vsub.f32 %v1244, %v1735
    %v1737 = vand.u32 %v1736, 4294901760
    %1738 = vmatpush1.msra.mxu0 %v1737
    %1739 = vmatprep.subr.mxu0 0.0
    %v1740 = vand.u32 %v1245, 4294901760
    %v1741 = vsub.f32 %v1245, %v1740
    %v1742 = vand.u32 %v1741, 4294901760
    %1743 = vmatpush1.msra.mxu0 %v1742
    %1744 = vmatprep.subr.mxu0 0.0
    %v1745 = vand.u32 %v1246, 4294901760
    %v1746 = vsub.f32 %v1246, %v1745
    %v1747 = vand.u32 %v1746, 4294901760
    %1748 = vmatpush1.msra.mxu0 %v1747
    %1749 = vmatprep.subr.mxu0 0.0
    %v1750 = vand.u32 %v1247, 4294901760
    %v1751 = vsub.f32 %v1247, %v1750
    %v1752 = vand.u32 %v1751, 4294901760
    %1753 = vmatpush1.msra.mxu0 %v1752
    %1754 = vmatprep.subr.mxu0 0.0
    %v1755 = vand.u32 %v1248, 4294901760
    %v1756 = vsub.f32 %v1248, %v1755
    %v1757 = vand.u32 %v1756, 4294901760
    %1758 = vmatpush1.msra.mxu0 %v1757
    %1759 = vmatprep.subr.mxu0 0.0
    %v1760 = vand.u32 %v1249, 4294901760
    %v1761 = vsub.f32 %v1249, %v1760
    %v1762 = vand.u32 %v1761, 4294901760
    %1763 = vmatpush1.msra.mxu0 %v1762
    %1764 = vmatprep.subr.mxu0 0.0
    %v1765 = vand.u32 %v1250, 4294901760
    %v1766 = vsub.f32 %v1250, %v1765
    %v1767 = vand.u32 %v1766, 4294901760
    %1768 = vmatpush1.msra.mxu0 %v1767
    %1769 = vmatprep.subr.mxu0 0.0
    %v1770 = vand.u32 %v1251, 4294901760
    %v1771 = vsub.f32 %v1251, %v1770
    %v1772 = vand.u32 %v1771, 4294901760
    %1773 = vmatpush1.msra.mxu0 %v1772
    %1774 = vmatprep.subr.mxu0 0.0
    %v1775 = vand.u32 %v1252, 4294901760
    %v1776 = vsub.f32 %v1252, %v1775
    %v1777 = vand.u32 %v1776, 4294901760
    %1778 = vmatpush1.msra.mxu0 %v1777
    %1779 = vmatprep.subr.mxu0 0.0
    %v1780 = vand.u32 %v1253, 4294901760
    %v1781 = vsub.f32 %v1253, %v1780
    %v1782 = vand.u32 %v1781, 4294901760
    %1783 = vmatpush1.msra.mxu0 %v1782
    %1784 = vmatprep.subr.mxu0 0.0
    %v1785 = vand.u32 %v1254, 4294901760
    %v1786 = vsub.f32 %v1254, %v1785
    %v1787 = vand.u32 %v1786, 4294901760
    %1788 = vmatpush1.msra.mxu0 %v1787
    %1789 = vmatprep.subr.mxu0 0.0
    %v1790 = vand.u32 %v1255, 4294901760
    %v1791 = vsub.f32 %v1255, %v1790
    %v1792 = vand.u32 %v1791, 4294901760
    %1793 = vmatpush1.msra.mxu0 %v1792
    %1794 = vmatprep.subr.mxu0 0.0
    %v1795 = vand.u32 %v1256, 4294901760
    %v1796 = vsub.f32 %v1256, %v1795
    %v1797 = vand.u32 %v1796, 4294901760
    %1798 = vmatpush1.msra.mxu0 %v1797
    %1799 = vmatprep.subr.mxu0 0.0
    %v1800 = vand.u32 %v1257, 4294901760
    %v1801 = vsub.f32 %v1257, %v1800
    %v1802 = vand.u32 %v1801, 4294901760
    %1803 = vmatpush1.msra.mxu0 %v1802
    %1804 = vmatprep.subr.mxu0 0.0
    %1805 = vmatpush1.msra.mxu0 0.0
    %1806 = vmatprep.subr.mxu0 0.0
    %1807 = vmatpush1.msra.mxu0 0.0
    %1808 = vmatprep.subr.mxu0 0.0
    %1809 = vmatpush1.msra.mxu0 0.0
    %1810 = vmatprep.subr.mxu0 0.0
    %1811 = vmatpush1.msra.mxu0 0.0
    %1812 = vmatprep.subr.mxu0 0.0
    %1813 = vmatpush1.msra.mxu0 0.0
    %1814 = vmatprep.subr.mxu0 0.0
    %1815 = vmatpush1.msra.mxu0 0.0
    %1816 = vmatprep.subr.mxu0 0.0
    %1817 = vmatpush1.msra.mxu0 0.0
    %1818 = vmatprep.subr.mxu0 0.0
    %1819 = vmatpush1.msra.mxu0 0.0
    %1820 = vmatprep.subr.mxu0 0.0
    %1821 = vmatpush1.msra.mxu0 0.0
    %1822 = vmatprep.subr.mxu0 0.0
    %1823 = vmatpush1.msra.mxu0 0.0
    %1824 = vmatprep.subr.mxu0 0.0
    %1825 = vmatpush1.msra.mxu0 0.0
    %1826 = vmatprep.subr.mxu0 0.0
    %1827 = vmatpush1.msra.mxu0 0.0
    %1828 = vmatprep.subr.mxu0 0.0
    %1829 = vmatpush1.msra.mxu0 0.0
    %1830 = vmatprep.subr.mxu0 0.0
    %1831 = vmatpush1.msra.mxu0 0.0
    %1832 = vmatprep.subr.mxu0 0.0
    %1833 = vmatpush1.msra.mxu0 0.0
    %1834 = vmatprep.subr.mxu0 0.0
    %1835 = vmatpush1.msra.mxu0 0.0
    %1836 = vmatprep.mubr.f32.mxu0 0.0
    %v1837 = vand.u32 %v1240, 4294901760
    %1838 = vmatmul.mubr.f32.gmra.mrb[0].mxu0 %v1837
    %v1839 = vpop.f32.mrb[0].mxu0
    %v1840 = vadd.f32 %v1713, %v1839
    %v1841 = vpop.f32.mrb[0].mxu0
    %1842 = vmatprep.mubr.f32.mxu0 0.0
    %v1843 = vand.u32 %v1241, 4294901760
    %1844 = vmatmul.mubr.f32.gmra.mrb[0].mxu0 %v1843
    %v1845 = vpop.f32.mrb[0].mxu0
    %v1846 = vadd.f32 %v1721, %v1845
    %v1847 = vpop.f32.mrb[0].mxu0
    %1848 = vdwg.mxu0
    %1849 = vmatprep.subr.mxu0 0.0
    %v1850 = vand.u32 %v1242, 4294901760
    %1851 = vmatpush1.msra.mxu0 %v1850
    %1852 = vmatprep.subr.mxu0 0.0
    %v1853 = vand.u32 %v1243, 4294901760
    %1854 = vmatpush1.msra.mxu0 %v1853
    %1855 = vmatprep.subr.mxu0 0.0
    %v1856 = vand.u32 %v1244, 4294901760
    %1857 = vmatpush1.msra.mxu0 %v1856
    %1858 = vmatprep.subr.mxu0 0.0
    %v1859 = vand.u32 %v1245, 4294901760
    %1860 = vmatpush1.msra.mxu0 %v1859
    %1861 = vmatprep.subr.mxu0 0.0
    %v1862 = vand.u32 %v1246, 4294901760
    %1863 = vmatpush1.msra.mxu0 %v1862
    %1864 = vmatprep.subr.mxu0 0.0
    %v1865 = vand.u32 %v1247, 4294901760
    %1866 = vmatpush1.msra.mxu0 %v1865
    %1867 = vmatprep.subr.mxu0 0.0
    %v1868 = vand.u32 %v1248, 4294901760
    %1869 = vmatpush1.msra.mxu0 %v1868
    %1870 = vmatprep.subr.mxu0 0.0
    %v1871 = vand.u32 %v1249, 4294901760
    %1872 = vmatpush1.msra.mxu0 %v1871
    %1873 = vmatprep.subr.mxu0 0.0
    %v1874 = vand.u32 %v1250, 4294901760
    %1875 = vmatpush1.msra.mxu0 %v1874
    %1876 = vmatprep.subr.mxu0 0.0
    %v1877 = vand.u32 %v1251, 4294901760
    %1878 = vmatpush1.msra.mxu0 %v1877
    %1879 = vmatprep.subr.mxu0 0.0
    %v1880 = vand.u32 %v1252, 4294901760
    %1881 = vmatpush1.msra.mxu0 %v1880
    %1882 = vmatprep.subr.mxu0 0.0
    %v1883 = vand.u32 %v1253, 4294901760
    %1884 = vmatpush1.msra.mxu0 %v1883
    %1885 = vmatprep.subr.mxu0 0.0
    %v1886 = vand.u32 %v1254, 4294901760
    %1887 = vmatpush1.msra.mxu0 %v1886
    %1888 = vmatprep.subr.mxu0 0.0
    %v1889 = vand.u32 %v1255, 4294901760
    %1890 = vmatpush1.msra.mxu0 %v1889
    %1891 = vmatprep.subr.mxu0 0.0
    %v1892 = vand.u32 %v1256, 4294901760
    %1893 = vmatpush1.msra.mxu0 %v1892
    %1894 = vmatprep.subr.mxu0 0.0
    %v1895 = vand.u32 %v1257, 4294901760
    %1896 = vmatpush1.msra.mxu0 %v1895
    %1897 = vmatprep.subr.mxu0 0.0
    %1898 = vmatpush1.msra.mxu0 0.0
    %1899 = vmatprep.subr.mxu0 0.0
    %1900 = vmatpush1.msra.mxu0 0.0
    %1901 = vmatprep.subr.mxu0 0.0
    %1902 = vmatpush1.msra.mxu0 0.0
    %1903 = vmatprep.subr.mxu0 0.0
    %1904 = vmatpush1.msra.mxu0 0.0
    %1905 = vmatprep.subr.mxu0 0.0
    %1906 = vmatpush1.msra.mxu0 0.0
    %1907 = vmatprep.subr.mxu0 0.0
    %1908 = vmatpush1.msra.mxu0 0.0
    %1909 = vmatprep.subr.mxu0 0.0
    %1910 = vmatpush1.msra.mxu0 0.0
    %1911 = vmatprep.subr.mxu0 0.0
    %1912 = vmatpush1.msra.mxu0 0.0
    %1913 = vmatprep.subr.mxu0 0.0
    %1914 = vmatpush1.msra.mxu0 0.0
    %1915 = vmatprep.subr.mxu0 0.0
    %1916 = vmatpush1.msra.mxu0 0.0
    %1917 = vmatprep.subr.mxu0 0.0
    %1918 = vmatpush1.msra.mxu0 0.0
    %1919 = vmatprep.subr.mxu0 0.0
    %1920 = vmatpush1.msra.mxu0 0.0
    %1921 = vmatprep.subr.mxu0 0.0
    %1922 = vmatpush1.msra.mxu0 0.0
    %1923 = vmatprep.subr.mxu0 0.0
    %1924 = vmatpush1.msra.mxu0 0.0
    %1925 = vmatprep.subr.mxu0 0.0
    %1926 = vmatpush1.msra.mxu0 0.0
    %1927 = vmatprep.subr.mxu0 0.0
    %1928 = vmatpush1.msra.mxu0 0.0
    %1929 = vmatprep.mubr.f32.mxu0 0.0
    %v1930 = vand.u32 %v1240, 4294901760
    %1931 = vmatmul.mubr.f32.gmra.mrb[0].mxu0 %v1930
    %v1932 = vpop.f32.mrb[0].mxu0
    %v1933 = vadd.f32 %v1840, %v1932
    %v1934 = vpop.f32.mrb[0].mxu0
    %1935 = vmatprep.mubr.f32.mxu0 0.0
    %v1936 = vand.u32 %v1241, 4294901760
    %1937 = vmatmul.mubr.f32.gmra.mrb[0].mxu0 %v1936
    %v1938 = vpop.f32.mrb[0].mxu0
    %v1939 = vadd.f32 %v1846, %v1938
    %v1940 = vpop.f32.mrb[0].mxu0
    %1941 = vdwg.mxu0
    %v1942 = vld [vmem:[%s7] sm:$0xff]
    %v1943 = vld [vmem:[%s6] sm:$0xff]
    %v1944 = vld [vmem:[%s6 + $0x8] sm:$0xff]
    %v1945 = vmul.f32 %v1933, %v1943
    %v1946 = vmul.f32 %v1939, %v1944
    %vm1947 = vcmask 130048
    %v1949 = vsel %vm1947, %v1942, 0
    %1951 = vmatprep.subr.mxu0 0.0
    %v1952 = vand.u32 %v1945, 4294901760
    %1953 = vmatpush1.msra.mxu0 %v1952
    %1954 = vmatprep.subr.mxu0 0.0
    %v1955 = vand.u32 %v1946, 4294901760
    %1956 = vmatpush1.msra.mxu0 %v1955
    %1957 = vmatprep.subr.mxu0 0.0
    %1958 = vmatpush1.msra.mxu0 0.0
    %1959 = vmatprep.subr.mxu0 0.0
    %1960 = vmatpush1.msra.mxu0 0.0
    %1961 = vmatprep.subr.mxu0 0.0
    %1962 = vmatpush1.msra.mxu0 0.0
    %1963 = vmatprep.subr.mxu0 0.0
    %1964 = vmatpush1.msra.mxu0 0.0
    %1965 = vmatprep.subr.mxu0 0.0
    %1966 = vmatpush1.msra.mxu0 0.0
    %1967 = vmatprep.subr.mxu0 0.0
    %1968 = vmatpush1.msra.mxu0 0.0
    %1969 = vmatprep.subr.mxu0 0.0
    %1970 = vmatpush1.msra.mxu0 0.0
    %1971 = vmatprep.subr.mxu0 0.0
    %1972 = vmatpush1.msra.mxu0 0.0
    %1973 = vmatprep.subr.mxu0 0.0
    %1974 = vmatpush1.msra.mxu0 0.0
    %1975 = vmatprep.subr.mxu0 0.0
    %1976 = vmatpush1.msra.mxu0 0.0
    %1977 = vmatprep.subr.mxu0 0.0
    %1978 = vmatpush1.msra.mxu0 0.0
    %1979 = vmatprep.subr.mxu0 0.0
    %1980 = vmatpush1.msra.mxu0 0.0
    %1981 = vmatprep.subr.mxu0 0.0
    %1982 = vmatpush1.msra.mxu0 0.0
    %1983 = vmatprep.subr.mxu0 0.0
    %1984 = vmatpush1.msra.mxu0 0.0
    %1985 = vmatprep.subr.mxu0 0.0
    %1986 = vmatpush1.msra.mxu0 0.0
    %1987 = vmatprep.subr.mxu0 0.0
    %1988 = vmatpush1.msra.mxu0 0.0
    %1989 = vmatprep.subr.mxu0 0.0
    %1990 = vmatpush1.msra.mxu0 0.0
    %1991 = vmatprep.subr.mxu0 0.0
    %1992 = vmatpush1.msra.mxu0 0.0
    %1993 = vmatprep.subr.mxu0 0.0
    %1994 = vmatpush1.msra.mxu0 0.0
    %1995 = vmatprep.subr.mxu0 0.0
    %1996 = vmatpush1.msra.mxu0 0.0
    %1997 = vmatprep.subr.mxu0 0.0
    %1998 = vmatpush1.msra.mxu0 0.0
    %1999 = vmatprep.subr.mxu0 0.0
    %2000 = vmatpush1.msra.mxu0 0.0
    %2001 = vmatprep.subr.mxu0 0.0
    %2002 = vmatpush1.msra.mxu0 0.0
    %2003 = vmatprep.subr.mxu0 0.0
    %2004 = vmatpush1.msra.mxu0 0.0
    %2005 = vmatprep.subr.mxu0 0.0
    %2006 = vmatpush1.msra.mxu0 0.0
    %2007 = vmatprep.subr.mxu0 0.0
    %2008 = vmatpush1.msra.mxu0 0.0
    %2009 = vmatprep.subr.mxu0 0.0
    %2010 = vmatpush1.msra.mxu0 0.0
    %2011 = vmatprep.subr.mxu0 0.0
    %2012 = vmatpush1.msra.mxu0 0.0
    %2013 = vmatprep.subr.mxu0 0.0
    %2014 = vmatpush1.msra.mxu0 0.0
    %2015 = vmatprep.subr.mxu0 0.0
    %2016 = vmatpush1.msra.mxu0 0.0
    %2017 = vmatprep.mubr.f32.mxu0 0.0
    %v2018 = vand.u32 %v1949, 4294901760
    %v2019 = vsub.f32 %v1949, %v2018
    %v2020 = vand.u32 %v2019, 4294901760
    %v2021 = vsub.f32 %v2019, %v2020
    %v2022 = vand.u32 %v2021, 4294901760
    %2023 = vmatmul.mubr.f32.gmra.mrb[0].mxu0 %v2022
    %v2024 = vpop.f32.mrb[0].mxu0
    %v2025 = vadd.f32 0.0, %v2024
    %v2026 = vpop.f32.mrb[0].mxu0
    %2027 = vdwg.mxu0
    %2028 = vmatprep.subr.mxu0 0.0
    %v2029 = vand.u32 %v1945, 4294901760
    %v2030 = vsub.f32 %v1945, %v2029
    %v2031 = vand.u32 %v2030, 4294901760
    %v2032 = vsub.f32 %v2030, %v2031
    %v2033 = vand.u32 %v2032, 4294901760
    %2034 = vmatpush1.msra.mxu0 %v2033
    %2035 = vmatprep.subr.mxu0 0.0
    %v2036 = vand.u32 %v1946, 4294901760
    %v2037 = vsub.f32 %v1946, %v2036
    %v2038 = vand.u32 %v2037, 4294901760
    %v2039 = vsub.f32 %v2037, %v2038
    %v2040 = vand.u32 %v2039, 4294901760
    %2041 = vmatpush1.msra.mxu0 %v2040
    %2042 = vmatprep.subr.mxu0 0.0
    %2043 = vmatpush1.msra.mxu0 0.0
    %2044 = vmatprep.subr.mxu0 0.0
    %2045 = vmatpush1.msra.mxu0 0.0
    %2046 = vmatprep.subr.mxu0 0.0
    %2047 = vmatpush1.msra.mxu0 0.0
    %2048 = vmatprep.subr.mxu0 0.0
    %2049 = vmatpush1.msra.mxu0 0.0
    %2050 = vmatprep.subr.mxu0 0.0
    %2051 = vmatpush1.msra.mxu0 0.0
    %2052 = vmatprep.subr.mxu0 0.0
    %2053 = vmatpush1.msra.mxu0 0.0
    %2054 = vmatprep.subr.mxu0 0.0
    %2055 = vmatpush1.msra.mxu0 0.0
    %2056 = vmatprep.subr.mxu0 0.0
    %2057 = vmatpush1.msra.mxu0 0.0
    %2058 = vmatprep.subr.mxu0 0.0
    %2059 = vmatpush1.msra.mxu0 0.0
    %2060 = vmatprep.subr.mxu0 0.0
    %2061 = vmatpush1.msra.mxu0 0.0
    %2062 = vmatprep.subr.mxu0 0.0
    %2063 = vmatpush1.msra.mxu0 0.0
    %2064 = vmatprep.subr.mxu0 0.0
    %2065 = vmatpush1.msra.mxu0 0.0
    %2066 = vmatprep.subr.mxu0 0.0
    %2067 = vmatpush1.msra.mxu0 0.0
    %2068 = vmatprep.subr.mxu0 0.0
    %2069 = vmatpush1.msra.mxu0 0.0
    %2070 = vmatprep.subr.mxu0 0.0
    %2071 = vmatpush1.msra.mxu0 0.0
    %2072 = vmatprep.subr.mxu0 0.0
    %2073 = vmatpush1.msra.mxu0 0.0
    %2074 = vmatprep.subr.mxu0 0.0
    %2075 = vmatpush1.msra.mxu0 0.0
    %2076 = vmatprep.subr.mxu0 0.0
    %2077 = vmatpush1.msra.mxu0 0.0
    %2078 = vmatprep.subr.mxu0 0.0
    %2079 = vmatpush1.msra.mxu0 0.0
    %2080 = vmatprep.subr.mxu0 0.0
    %2081 = vmatpush1.msra.mxu0 0.0
    %2082 = vmatprep.subr.mxu0 0.0
    %2083 = vmatpush1.msra.mxu0 0.0
    %2084 = vmatprep.subr.mxu0 0.0
    %2085 = vmatpush1.msra.mxu0 0.0
    %2086 = vmatprep.subr.mxu0 0.0
    %2087 = vmatpush1.msra.mxu0 0.0
    %2088 = vmatprep.subr.mxu0 0.0
    %2089 = vmatpush1.msra.mxu0 0.0
    %2090 = vmatprep.subr.mxu0 0.0
    %2091 = vmatpush1.msra.mxu0 0.0
    %2092 = vmatprep.subr.mxu0 0.0
    %2093 = vmatpush1.msra.mxu0 0.0
    %2094 = vmatprep.subr.mxu0 0.0
    %2095 = vmatpush1.msra.mxu0 0.0
    %2096 = vmatprep.subr.mxu0 0.0
    %2097 = vmatpush1.msra.mxu0 0.0
    %2098 = vmatprep.subr.mxu0 0.0
    %2099 = vmatpush1.msra.mxu0 0.0
    %2100 = vmatprep.subr.mxu0 0.0
    %2101 = vmatpush1.msra.mxu0 0.0
    %2102 = vmatprep.mubr.f32.mxu0 0.0
    %v2103 = vand.u32 %v1949, 4294901760
    %2104 = vmatmul.mubr.f32.gmra.mrb[0].mxu0 %v2103
    %v2105 = vpop.f32.mrb[0].mxu0
    %v2106 = vadd.f32 %v2025, %v2105
    %v2107 = vpop.f32.mrb[0].mxu0
    %2108 = vdwg.mxu0
    %2109 = vmatprep.subr.mxu0 0.0
    %v2110 = vand.u32 %v1945, 4294901760
    %v2111 = vsub.f32 %v1945, %v2110
    %2112 = vmatpush1.msra.mxu0 %v2111
    %2113 = vmatprep.subr.mxu0 0.0
    %v2114 = vand.u32 %v1946, 4294901760
    %v2115 = vsub.f32 %v1946, %v2114
    %2116 = vmatpush1.msra.mxu0 %v2115
    %2117 = vmatprep.subr.mxu0 0.0
    %2118 = vmatpush1.msra.mxu0 0.0
    %2119 = vmatprep.subr.mxu0 0.0
    %2120 = vmatpush1.msra.mxu0 0.0
    %2121 = vmatprep.subr.mxu0 0.0
    %2122 = vmatpush1.msra.mxu0 0.0
    %2123 = vmatprep.subr.mxu0 0.0
    %2124 = vmatpush1.msra.mxu0 0.0
    %2125 = vmatprep.subr.mxu0 0.0
    %2126 = vmatpush1.msra.mxu0 0.0
    %2127 = vmatprep.subr.mxu0 0.0
    %2128 = vmatpush1.msra.mxu0 0.0
    %2129 = vmatprep.subr.mxu0 0.0
    %2130 = vmatpush1.msra.mxu0 0.0
    %2131 = vmatprep.subr.mxu0 0.0
    %2132 = vmatpush1.msra.mxu0 0.0
    %2133 = vmatprep.subr.mxu0 0.0
    %2134 = vmatpush1.msra.mxu0 0.0
    %2135 = vmatprep.subr.mxu0 0.0
    %2136 = vmatpush1.msra.mxu0 0.0
    %2137 = vmatprep.subr.mxu0 0.0
    %2138 = vmatpush1.msra.mxu0 0.0
    %2139 = vmatprep.subr.mxu0 0.0
    %2140 = vmatpush1.msra.mxu0 0.0
    %2141 = vmatprep.subr.mxu0 0.0
    %2142 = vmatpush1.msra.mxu0 0.0
    %2143 = vmatprep.subr.mxu0 0.0
    %2144 = vmatpush1.msra.mxu0 0.0
    %2145 = vmatprep.subr.mxu0 0.0
    %2146 = vmatpush1.msra.mxu0 0.0
    %2147 = vmatprep.subr.mxu0 0.0
    %2148 = vmatpush1.msra.mxu0 0.0
    %2149 = vmatprep.subr.mxu0 0.0
    %2150 = vmatpush1.msra.mxu0 0.0
    %2151 = vmatprep.subr.mxu0 0.0
    %2152 = vmatpush1.msra.mxu0 0.0
    %2153 = vmatprep.subr.mxu0 0.0
    %2154 = vmatpush1.msra.mxu0 0.0
    %2155 = vmatprep.subr.mxu0 0.0
    %2156 = vmatpush1.msra.mxu0 0.0
    %2157 = vmatprep.subr.mxu0 0.0
    %2158 = vmatpush1.msra.mxu0 0.0
    %2159 = vmatprep.subr.mxu0 0.0
    %2160 = vmatpush1.msra.mxu0 0.0
    %2161 = vmatprep.subr.mxu0 0.0
    %2162 = vmatpush1.msra.mxu0 0.0
    %2163 = vmatprep.subr.mxu0 0.0
    %2164 = vmatpush1.msra.mxu0 0.0
    %2165 = vmatprep.subr.mxu0 0.0
    %2166 = vmatpush1.msra.mxu0 0.0
    %2167 = vmatprep.subr.mxu0 0.0
    %2168 = vmatpush1.msra.mxu0 0.0
    %2169 = vmatprep.subr.mxu0 0.0
    %2170 = vmatpush1.msra.mxu0 0.0
    %2171 = vmatprep.subr.mxu0 0.0
    %2172 = vmatpush1.msra.mxu0 0.0
    %2173 = vmatprep.subr.mxu0 0.0
    %2174 = vmatpush1.msra.mxu0 0.0
    %2175 = vmatprep.subr.mxu0 0.0
    %2176 = vmatpush1.msra.mxu0 0.0
    %2177 = vmatprep.mubr.f32.mxu0 0.0
    %v2178 = vand.u32 %v1949, 4294901760
    %v2179 = vsub.f32 %v1949, %v2178
    %2180 = vmatmul.mubr.f32.gmra.mrb[0].mxu0 %v2179
    %v2181 = vpop.f32.mrb[0].mxu0
    %v2182 = vadd.f32 %v2106, %v2181
    %v2183 = vpop.f32.mrb[0].mxu0
    %2184 = vdwg.mxu0
    %2185 = vmatprep.subr.mxu0 0.0
    %v2186 = vand.u32 %v1945, 4294901760
    %2187 = vmatpush1.msra.mxu0 %v2186
    %2188 = vmatprep.subr.mxu0 0.0
    %v2189 = vand.u32 %v1946, 4294901760
    %2190 = vmatpush1.msra.mxu0 %v2189
    %2191 = vmatprep.subr.mxu0 0.0
    %2192 = vmatpush1.msra.mxu0 0.0
    %2193 = vmatprep.subr.mxu0 0.0
    %2194 = vmatpush1.msra.mxu0 0.0
    %2195 = vmatprep.subr.mxu0 0.0
    %2196 = vmatpush1.msra.mxu0 0.0
    %2197 = vmatprep.subr.mxu0 0.0
    %2198 = vmatpush1.msra.mxu0 0.0
    %2199 = vmatprep.subr.mxu0 0.0
    %2200 = vmatpush1.msra.mxu0 0.0
    %2201 = vmatprep.subr.mxu0 0.0
    %2202 = vmatpush1.msra.mxu0 0.0
    %2203 = vmatprep.subr.mxu0 0.0
    %2204 = vmatpush1.msra.mxu0 0.0
    %2205 = vmatprep.subr.mxu0 0.0
    %2206 = vmatpush1.msra.mxu0 0.0
    %2207 = vmatprep.subr.mxu0 0.0
    %2208 = vmatpush1.msra.mxu0 0.0
    %2209 = vmatprep.subr.mxu0 0.0
    %2210 = vmatpush1.msra.mxu0 0.0
    %2211 = vmatprep.subr.mxu0 0.0
    %2212 = vmatpush1.msra.mxu0 0.0
    %2213 = vmatprep.subr.mxu0 0.0
    %2214 = vmatpush1.msra.mxu0 0.0
    %2215 = vmatprep.subr.mxu0 0.0
    %2216 = vmatpush1.msra.mxu0 0.0
    %2217 = vmatprep.subr.mxu0 0.0
    %2218 = vmatpush1.msra.mxu0 0.0
    %2219 = vmatprep.subr.mxu0 0.0
    %2220 = vmatpush1.msra.mxu0 0.0
    %2221 = vmatprep.subr.mxu0 0.0
    %2222 = vmatpush1.msra.mxu0 0.0
    %2223 = vmatprep.subr.mxu0 0.0
    %2224 = vmatpush1.msra.mxu0 0.0
    %2225 = vmatprep.subr.mxu0 0.0
    %2226 = vmatpush1.msra.mxu0 0.0
    %2227 = vmatprep.subr.mxu0 0.0
    %2228 = vmatpush1.msra.mxu0 0.0
    %2229 = vmatprep.subr.mxu0 0.0
    %2230 = vmatpush1.msra.mxu0 0.0
    %2231 = vmatprep.subr.mxu0 0.0
    %2232 = vmatpush1.msra.mxu0 0.0
    %2233 = vmatprep.subr.mxu0 0.0
    %2234 = vmatpush1.msra.mxu0 0.0
    %2235 = vmatprep.subr.mxu0 0.0
    %2236 = vmatpush1.msra.mxu0 0.0
    %2237 = vmatprep.subr.mxu0 0.0
    %2238 = vmatpush1.msra.mxu0 0.0
    %2239 = vmatprep.subr.mxu0 0.0
    %2240 = vmatpush1.msra.mxu0 0.0
    %2241 = vmatprep.subr.mxu0 0.0
    %2242 = vmatpush1.msra.mxu0 0.0
    %2243 = vmatprep.subr.mxu0 0.0
    %2244 = vmatpush1.msra.mxu0 0.0
    %2245 = vmatprep.subr.mxu0 0.0
    %2246 = vmatpush1.msra.mxu0 0.0
    %2247 = vmatprep.subr.mxu0 0.0
    %2248 = vmatpush1.msra.mxu0 0.0
    %2249 = vmatprep.subr.mxu0 0.0
    %2250 = vmatpush1.msra.mxu0 0.0
    %2251 = vmatprep.mubr.f32.mxu0 0.0
    %v2252 = vand.u32 %v1949, 4294901760
    %v2253 = vsub.f32 %v1949, %v2252
    %v2254 = vand.u32 %v2253, 4294901760
    %2255 = vmatmul.mubr.f32.gmra.mrb[0].mxu0 %v2254
    %v2256 = vpop.f32.mrb[0].mxu0
    %v2257 = vadd.f32 %v2182, %v2256
    %v2258 = vpop.f32.mrb[0].mxu0
    %2259 = vdwg.mxu0
    %2260 = vmatprep.subr.mxu0 0.0
    %v2261 = vand.u32 %v1945, 4294901760
    %v2262 = vsub.f32 %v1945, %v2261
    %v2263 = vand.u32 %v2262, 4294901760
    %2264 = vmatpush1.msra.mxu0 %v2263
    %2265 = vmatprep.subr.mxu0 0.0
    %v2266 = vand.u32 %v1946, 4294901760
    %v2267 = vsub.f32 %v1946, %v2266
    %v2268 = vand.u32 %v2267, 4294901760
    %2269 = vmatpush1.msra.mxu0 %v2268
    %2270 = vmatprep.subr.mxu0 0.0
    %2271 = vmatpush1.msra.mxu0 0.0
    %2272 = vmatprep.subr.mxu0 0.0
    %2273 = vmatpush1.msra.mxu0 0.0
    %2274 = vmatprep.subr.mxu0 0.0
    %2275 = vmatpush1.msra.mxu0 0.0
    %2276 = vmatprep.subr.mxu0 0.0
    %2277 = vmatpush1.msra.mxu0 0.0
    %2278 = vmatprep.subr.mxu0 0.0
    %2279 = vmatpush1.msra.mxu0 0.0
    %2280 = vmatprep.subr.mxu0 0.0
    %2281 = vmatpush1.msra.mxu0 0.0
    %2282 = vmatprep.subr.mxu0 0.0
    %2283 = vmatpush1.msra.mxu0 0.0
    %2284 = vmatprep.subr.mxu0 0.0
    %2285 = vmatpush1.msra.mxu0 0.0
    %2286 = vmatprep.subr.mxu0 0.0
    %2287 = vmatpush1.msra.mxu0 0.0
    %2288 = vmatprep.subr.mxu0 0.0
    %2289 = vmatpush1.msra.mxu0 0.0
    %2290 = vmatprep.subr.mxu0 0.0
    %2291 = vmatpush1.msra.mxu0 0.0
    %2292 = vmatprep.subr.mxu0 0.0
    %2293 = vmatpush1.msra.mxu0 0.0
    %2294 = vmatprep.subr.mxu0 0.0
    %2295 = vmatpush1.msra.mxu0 0.0
    %2296 = vmatprep.subr.mxu0 0.0
    %2297 = vmatpush1.msra.mxu0 0.0
    %2298 = vmatprep.subr.mxu0 0.0
    %2299 = vmatpush1.msra.mxu0 0.0
    %2300 = vmatprep.subr.mxu0 0.0
    %2301 = vmatpush1.msra.mxu0 0.0
    %2302 = vmatprep.subr.mxu0 0.0
    %2303 = vmatpush1.msra.mxu0 0.0
    %2304 = vmatprep.subr.mxu0 0.0
    %2305 = vmatpush1.msra.mxu0 0.0
    %2306 = vmatprep.subr.mxu0 0.0
    %2307 = vmatpush1.msra.mxu0 0.0
    %2308 = vmatprep.subr.mxu0 0.0
    %2309 = vmatpush1.msra.mxu0 0.0
    %2310 = vmatprep.subr.mxu0 0.0
    %2311 = vmatpush1.msra.mxu0 0.0
    %2312 = vmatprep.subr.mxu0 0.0
    %2313 = vmatpush1.msra.mxu0 0.0
    %2314 = vmatprep.subr.mxu0 0.0
    %2315 = vmatpush1.msra.mxu0 0.0
    %2316 = vmatprep.subr.mxu0 0.0
    %2317 = vmatpush1.msra.mxu0 0.0
    %2318 = vmatprep.subr.mxu0 0.0
    %2319 = vmatpush1.msra.mxu0 0.0
    %2320 = vmatprep.subr.mxu0 0.0
    %2321 = vmatpush1.msra.mxu0 0.0
    %2322 = vmatprep.subr.mxu0 0.0
    %2323 = vmatpush1.msra.mxu0 0.0
    %2324 = vmatprep.subr.mxu0 0.0
    %2325 = vmatpush1.msra.mxu0 0.0
    %2326 = vmatprep.subr.mxu0 0.0
    %2327 = vmatpush1.msra.mxu0 0.0
    %2328 = vmatprep.subr.mxu0 0.0
    %2329 = vmatpush1.msra.mxu0 0.0
    %2330 = vmatprep.mubr.f32.mxu0 0.0
    %v2331 = vand.u32 %v1949, 4294901760
    %2332 = vmatmul.mubr.f32.gmra.mrb[0].mxu0 %v2331
    %v2333 = vpop.f32.mrb[0].mxu0
    %v2334 = vadd.f32 %v2257, %v2333
    %v2335 = vpop.f32.mrb[0].mxu0
    %2336 = vdwg.mxu0
    %2337 = vmatprep.subr.mxu0 0.0
    %v2338 = vand.u32 %v1945, 4294901760
    %2339 = vmatpush1.msra.mxu0 %v2338
    %2340 = vmatprep.subr.mxu0 0.0
    %v2341 = vand.u32 %v1946, 4294901760
    %2342 = vmatpush1.msra.mxu0 %v2341
    %2343 = vmatprep.subr.mxu0 0.0
    %2344 = vmatpush1.msra.mxu0 0.0
    %2345 = vmatprep.subr.mxu0 0.0
    %2346 = vmatpush1.msra.mxu0 0.0
    %2347 = vmatprep.subr.mxu0 0.0
    %2348 = vmatpush1.msra.mxu0 0.0
    %2349 = vmatprep.subr.mxu0 0.0
    %2350 = vmatpush1.msra.mxu0 0.0
    %2351 = vmatprep.subr.mxu0 0.0
    %2352 = vmatpush1.msra.mxu0 0.0
    %2353 = vmatprep.subr.mxu0 0.0
    %2354 = vmatpush1.msra.mxu0 0.0
    %2355 = vmatprep.subr.mxu0 0.0
    %2356 = vmatpush1.msra.mxu0 0.0
    %2357 = vmatprep.subr.mxu0 0.0
    %2358 = vmatpush1.msra.mxu0 0.0
    %2359 = vmatprep.subr.mxu0 0.0
    %2360 = vmatpush1.msra.mxu0 0.0
    %2361 = vmatprep.subr.mxu0 0.0
    %2362 = vmatpush1.msra.mxu0 0.0
    %2363 = vmatprep.subr.mxu0 0.0
    %2364 = vmatpush1.msra.mxu0 0.0
    %2365 = vmatprep.subr.mxu0 0.0
    %2366 = vmatpush1.msra.mxu0 0.0
    %2367 = vmatprep.subr.mxu0 0.0
    %2368 = vmatpush1.msra.mxu0 0.0
    %2369 = vmatprep.subr.mxu0 0.0
    %2370 = vmatpush1.msra.mxu0 0.0
    %2371 = vmatprep.subr.mxu0 0.0
    %2372 = vmatpush1.msra.mxu0 0.0
    %2373 = vmatprep.subr.mxu0 0.0
    %2374 = vmatpush1.msra.mxu0 0.0
    %2375 = vmatprep.subr.mxu0 0.0
    %2376 = vmatpush1.msra.mxu0 0.0
    %2377 = vmatprep.subr.mxu0 0.0
    %2378 = vmatpush1.msra.mxu0 0.0
    %2379 = vmatprep.subr.mxu0 0.0
    %2380 = vmatpush1.msra.mxu0 0.0
    %2381 = vmatprep.subr.mxu0 0.0
    %2382 = vmatpush1.msra.mxu0 0.0
    %2383 = vmatprep.subr.mxu0 0.0
    %2384 = vmatpush1.msra.mxu0 0.0
    %2385 = vmatprep.subr.mxu0 0.0
    %2386 = vmatpush1.msra.mxu0 0.0
    %2387 = vmatprep.subr.mxu0 0.0
    %2388 = vmatpush1.msra.mxu0 0.0
    %2389 = vmatprep.subr.mxu0 0.0
    %2390 = vmatpush1.msra.mxu0 0.0
    %2391 = vmatprep.subr.mxu0 0.0
    %2392 = vmatpush1.msra.mxu0 0.0
    %2393 = vmatprep.subr.mxu0 0.0
    %2394 = vmatpush1.msra.mxu0 0.0
    %2395 = vmatprep.subr.mxu0 0.0
    %2396 = vmatpush1.msra.mxu0 0.0
    %2397 = vmatprep.subr.mxu0 0.0
    %2398 = vmatpush1.msra.mxu0 0.0
    %2399 = vmatprep.subr.mxu0 0.0
    %2400 = vmatpush1.msra.mxu0 0.0
    %2401 = vmatprep.subr.mxu0 0.0
    %2402 = vmatpush1.msra.mxu0 0.0
    %2403 = vmatprep.mubr.f32.mxu0 0.0
    %v2404 = vand.u32 %v1949, 4294901760
    %2405 = vmatmul.mubr.f32.gmra.mrb[0].mxu0 %v2404
    %v2406 = vpop.f32.mrb[0].mxu0
    %v2407 = vadd.f32 %v2334, %v2406
    %v2408 = vpop.f32.mrb[0].mxu0
    %2409 = vdwg.mxu0
    %v2410 = vsel %vm744, %v2407, -inf
    %2411 = vmax.xlane.f32.xlu0 %v2410
    %v2412 = vpop.xlane.xlu0 %2411
    %v2413 = vsub.f32 %v2407, %v2412
    %v2414 = vmul.f32 %v2413, 1.442695
    %v2415 = vpow.pop %v2414
    %v2416 = vsel %vm744, %v2415, 0.0
    %2417 = vadd.xlane.f32.xlu0 %v2416
    %v2418 = vpop.xlane.xlu0 %2417
    %v2419 = vrcp.pop %v2418
    %v2420 = vmul.f32 %v2415, %v2419
    %2421 = vst.msk [vmem:[#allocation2] sm:$0xff] %vm744, %v2420
    // Predicated region
    $region34: #{tpu_custom_call.1} parent=1 // pred_check
      _
    $region35: #{tpu_custom_call.1} parent=1 // pred_check_branch
      %2423 = sbr.rel (0) target = $region37
    $region36: #{tpu_custom_call.1} parent=1 // pred_region
      %s2425 = ssub.s32 128, 128
      %2426 = vsyncadd [#allocation3], %s2425
      %s2428 = sshll.u32 [#allocation2], 4
      %s2429 = int_to_ptr.vmem [resolvable:$true] %s2428
      %2431 = dma.vmem_to_hbm [thread:$0]  %s2429, 128, %s8, [#allocation3]
    $region37: #{tpu_custom_call.1} parent=1 // pred_fallthru
      _
    // Predicated region
    $region38: #{tpu_custom_call.1} parent=1 // pred_check
      _
    $region39: #{tpu_custom_call.1} parent=1 // pred_check_branch
      %2433 = sbr.rel (0) target = $region41
    $region40: #{tpu_custom_call.1} parent=1 // pred_region
      %2434 = dma.done [#allocation3], 128
    $region41: #{tpu_custom_call.1} parent=1 // pred_fallthru
      _
    %2435 = vsyncpa [#allocation3], 1

</llo_original>
